<compile_context>
chip_gen: v6e
topology: v6e:2x2x1
jax: 0.10.0
libtpu: 0.0.40
codegen_flags: <defaults>
</compile_context>

<pallas_src>
import functools

import jax
import jax.numpy as jnp
import numpy as np
from jax.experimental import pallas as pl
from jax.experimental.pallas import tpu as pltpu


def _attention_task_head_kernel(
    x_ref,        # (Bt, S, E)   activations
    wqkvT_ref,    # (E, 3E)      fused [Wq | Wk | Wv]^T, compute dtype (f32 or bf16)
    bqkv_ref,     # (1, 3E)      f32
    woT_ref,      # (E, E)       attention out-proj (transposed), compute dtype
    bo_ref,       # (1, E)       f32
    gamma_ref,    # (1, E)       f32
    beta_ref,     # (1, E)       f32
    wlT_ref,      # (E, Cp)      final linear (transposed, lane-padded), compute dtype
    bl_ref,       # (1, Cp)      f32
    out_ref,      # (Bt, S, Cp)
    *, num_heads,
):
    Bt, S, E = x_ref.shape
    H = num_heads
    Dh = E // H
    R = Bt * S
    scale = 1.0 / float(np.sqrt(Dh))
    cd = wqkvT_ref.dtype  # MXU operand dtype; accumulation / elementwise stays f32

    xf = x_ref[...].astype(jnp.float32).reshape(R, E)        # (R, E) f32 (kept for residual)

    # Fused QKV projection: one wide MXU matmul (R, E) x (E, 3E).
    qkv = jnp.dot(xf.astype(cd), wqkvT_ref[...],
                  preferred_element_type=jnp.float32) + bqkv_ref[...]
    qkv = qkv.reshape(Bt, S, 3 * E).astype(cd)

    # Per-head attention, batched over Bt with 3-D einsums (no kh.T transpose).
    head_outs = []
    for h in range(H):
        qh = qkv[:, :, h * Dh:(h + 1) * Dh]                  # (Bt, S, Dh)
        kh = qkv[:, :, E + h * Dh:E + (h + 1) * Dh]
        vh = qkv[:, :, 2 * E + h * Dh:2 * E + (h + 1) * Dh]
        s = jnp.einsum("bqd,bkd->bqk", qh, kh,
                       preferred_element_type=jnp.float32) * scale   # (Bt, S, S) f32
        s = s - jnp.max(s, axis=-1, keepdims=True)
        p = jnp.exp(s)
        # reciprocal on the EUP slot instead of a VPU divide
        p = p * pl.reciprocal(jnp.sum(p, axis=-1, keepdims=True), approx=True)
        head_outs.append(
            jnp.einsum("bqk,bkd->bqd", p.astype(cd), vh,
                       preferred_element_type=jnp.float32))          # (Bt, S, Dh) f32
    attn = jnp.concatenate(head_outs, axis=-1).reshape(R, E)         # (R, E) f32

    # Attention output projection.
    attn = jnp.dot(attn.astype(cd), woT_ref[...],
                   preferred_element_type=jnp.float32) + bo_ref[...]

    # Residual + LayerNorm (torch semantics: biased variance, eps=1e-5), f32 throughout.
    h_res = xf + attn
    mean = jnp.mean(h_res, axis=-1, keepdims=True)
    var = jnp.mean((h_res - mean) ** 2, axis=-1, keepdims=True)
    normed = (h_res - mean) * jax.lax.rsqrt(var + 1e-5)
    normed = normed * gamma_ref[...] + beta_ref[...]

    # Dropout: identity in eval mode.
    # TODO(synk): training-mode dropout (attention-weight dropout + post-norm dropout) not implemented.

    # Final linear head, lane-padded to Cp for an unmasked, lane-dense store.
    y = jnp.dot(normed.astype(cd), wlT_ref[...],
                preferred_element_type=jnp.float32) + bl_ref[...]     # (R, Cp)
    out_ref[...] = y.reshape(Bt, S, -1).astype(out_ref.dtype)


def prepack_params(params, *, compute_dtype=jnp.float32):
    """One-time packing of parameters for the kernel (hoisted out of the hot path):
    fused + transposed QKV weight, transposed projections, lane-padded final linear,
    optional bf16 cast of MXU operands (biases / LN params stay f32)."""
    E = params["out_proj_w"].shape[0]
    C = params["linear_w"].shape[0]
    Cp = ((C + 127) // 128) * 128

    wlT = jnp.zeros((E, Cp), compute_dtype).at[:, :C].set(
        params["linear_w"].T.astype(compute_dtype))
    bl = jnp.zeros((1, Cp), jnp.float32).at[:, :C].set(
        params["linear_b"].astype(jnp.float32).reshape(1, C))

    return {
        "wqkvT": params["in_proj_w"].T.astype(compute_dtype),          # (E, 3E)
        "bqkv": params["in_proj_b"].astype(jnp.float32).reshape(1, 3 * E),
        "woT": params["out_proj_w"].T.astype(compute_dtype),           # (E, E)
        "bo": params["out_proj_b"].astype(jnp.float32).reshape(1, E),
        "gamma": params["ln_gamma"].astype(jnp.float32).reshape(1, E),
        "beta": params["ln_beta"].astype(jnp.float32).reshape(1, E),
        "wlT": wlT,                                                    # (E, Cp)
        "bl": bl,                                                      # (1, Cp)
    }


def _pick_block_batch(B, S):
    """Sequences per grid step: enough rows (~256) to amortize per-step overhead and feed
    the MXU, but keep >= 2 grid steps so both v7x TensorCores get work."""
    target = max(1, 256 // max(S, 1))
    if B >= 2:
        target = min(target, max(1, B // 2))
    target = min(target, B)
    for bt in range(target, 0, -1):
        if B % bt == 0:
            return bt
    return 1


def attention_task_head(x, packed, *, out_channels, num_heads=2, block_batch=None):
    B, S, E = x.shape
    assert E % num_heads == 0, "embedding_size must be divisible by num_heads"
    Cp = packed["wlT"].shape[1]
    Bt = block_batch if block_batch is not None else _pick_block_batch(B, S)
    assert B % Bt == 0, "batch must be divisible by block_batch"

    def full_spec(shape):
        nd = len(shape)
        return pl.BlockSpec(shape, lambda b, _nd=nd: (0,) * _nd)

    in_specs = [
        pl.BlockSpec((Bt, S, E), lambda b: (b, 0, 0)),                 # x
        full_spec(packed["wqkvT"].shape), full_spec(packed["bqkv"].shape),
        full_spec(packed["woT"].shape), full_spec(packed["bo"].shape),
        full_spec(packed["gamma"].shape), full_spec(packed["beta"].shape),
        full_spec(packed["wlT"].shape), full_spec(packed["bl"].shape),
    ]

    kernel = functools.partial(_attention_task_head_kernel, num_heads=num_heads)
    out_padded = pl.pallas_call(
        kernel,
        out_shape=jax.ShapeDtypeStruct((B, S, Cp), x.dtype),
        grid=(B // Bt,),
        in_specs=in_specs,
        out_specs=pl.BlockSpec((Bt, S, Cp), lambda b: (b, 0, 0)),
        compiler_params=pltpu.CompilerParams(
            dimension_semantics=("parallel",),
            vmem_limit_bytes=64 * 1024 * 1024,
        ),
    )(x, packed["wqkvT"], packed["bqkv"], packed["woT"], packed["bo"],
      packed["gamma"], packed["beta"], packed["wlT"], packed["bl"])

    return out_padded[..., :out_channels]


def attention_task_head_reference(x, params, *, num_heads=2):
    """Pure-JAX reference mirroring the PyTorch forward (eval mode)."""
    B, S, E = x.shape
    Wq, Wk, Wv = jnp.split(params["in_proj_w"], 3, axis=0)
    bq, bk, bv = jnp.split(params["in_proj_b"], 3, axis=0)
    q = x @ Wq.T + bq
    k = x @ Wk.T + bk
    v = x @ Wv.T + bv
    Dh = E // num_heads
    q = q.reshape(B, S, num_heads, Dh).transpose(0, 2, 1, 3)
    k = k.reshape(B, S, num_heads, Dh).transpose(0, 2, 1, 3)
    v = v.reshape(B, S, num_heads, Dh).transpose(0, 2, 1, 3)
    s = jnp.einsum("bhqd,bhkd->bhqk", q, k) / jnp.sqrt(Dh)
    p = jax.nn.softmax(s, axis=-1)
    attn = jnp.einsum("bhqk,bhkd->bhqd", p, v).transpose(0, 2, 1, 3).reshape(B, S, E)
    attn = attn @ params["out_proj_w"].T + params["out_proj_b"]
    h = x + attn
    mean = h.mean(-1, keepdims=True)
    var = ((h - mean) ** 2).mean(-1, keepdims=True)
    normed = (h - mean) / jnp.sqrt(var + 1e-5)
    normed = normed * params["ln_gamma"] + params["ln_beta"]
    return normed @ params["linear_w"].T + params["linear_b"]


def init_params(key, embedding_size, out_channels):
    E, C = embedding_size, out_channels
    ks = jax.random.split(key, 5)
    scale = 0.1
    return {
        "in_proj_w": jax.random.normal(ks[0], (3 * E, E), jnp.float32) * scale,
        "in_proj_b": jax.random.normal(ks[1], (3 * E,), jnp.float32) * scale,
        "out_proj_w": jax.random.normal(ks[2], (E, E), jnp.float32) * scale,
        "out_proj_b": jnp.zeros((E,), jnp.float32),
        "ln_gamma": jnp.ones((E,), jnp.float32),
        "ln_beta": jnp.zeros((E,), jnp.float32),
        "linear_w": jax.random.normal(ks[3], (C, E), jnp.float32) * scale,
        "linear_b": jax.random.normal(ks[4], (C,), jnp.float32) * scale,
    }


if __name__ == "__main__":
    B, S, E, C, H = 8, 8, 32, 1, 2
    key = jax.random.PRNGKey(0)
    kx, kp = jax.random.split(key)
    x = jax.random.normal(kx, (B, S, E), jnp.float32)
    params = init_params(kp, E, C)

    ref = attention_task_head_reference(x, params, num_heads=H)

    # f32 MXU path (tight check; approx EUP reciprocal in softmax -> small tolerance).
    packed_f32 = prepack_params(params, compute_dtype=jnp.float32)
    out = jax.block_until_ready(
        attention_task_head(x, packed_f32, out_channels=C, num_heads=H))
    np.testing.assert_allclose(np.asarray(out), np.asarray(ref), atol=5e-3, rtol=5e-3)

    # bf16 MXU-operand path (v5e/v6e/v7x MXU-native; elementwise math stays f32).
    packed_bf16 = prepack_params(params, compute_dtype=jnp.bfloat16)
    out_bf16 = jax.block_until_ready(
        attention_task_head(x, packed_bf16, out_channels=C, num_heads=H))
    np.testing.assert_allclose(np.asarray(out_bf16), np.asarray(ref), atol=6e-2, rtol=6e-2)

    print("KERNEL_OK")
</pallas_src>

<mosaic_0001>
module attributes {stable_mosaic.version = 11 : i64} {
  func.func @_attention_task_head_kernel(%arg0: i32, %arg1: memref<4x8x32xf32, #tpu.memory_space<vmem>>, %arg2: memref<32x96xf32, #tpu.memory_space<vmem>>, %arg3: memref<1x96xf32, #tpu.memory_space<vmem>>, %arg4: memref<32x32xf32, #tpu.memory_space<vmem>>, %arg5: memref<1x32xf32, #tpu.memory_space<vmem>>, %arg6: memref<1x32xf32, #tpu.memory_space<vmem>>, %arg7: memref<1x32xf32, #tpu.memory_space<vmem>>, %arg8: memref<32x128xf32, #tpu.memory_space<vmem>>, %arg9: memref<1x128xf32, #tpu.memory_space<vmem>>, %arg10: memref<4x8x128xf32, #tpu.memory_space<vmem>>) attributes {dimension_semantics = [#tpu.dimension_semantics<parallel>], iteration_bounds = array<i64: 2>, scalar_prefetch = 0 : i64, scratch_operands = 0 : i64, tpu.core_type = #tpu.core_type<tc>, window_params = [{transform_indices = @transform_0, window_bounds = array<i64: 4, 8, 32>}, {pipeline_mode = #tpu.pipeline_mode<synchronous>, transform_indices = @transform_1, window_bounds = array<i64: 32, 96>}, {pipeline_mode = #tpu.pipeline_mode<synchronous>, transform_indices = @transform_2, window_bounds = array<i64: 1, 96>}, {pipeline_mode = #tpu.pipeline_mode<synchronous>, transform_indices = @transform_3, window_bounds = array<i64: 32, 32>}, {pipeline_mode = #tpu.pipeline_mode<synchronous>, transform_indices = @transform_4, window_bounds = array<i64: 1, 32>}, {pipeline_mode = #tpu.pipeline_mode<synchronous>, transform_indices = @transform_5, window_bounds = array<i64: 1, 32>}, {pipeline_mode = #tpu.pipeline_mode<synchronous>, transform_indices = @transform_6, window_bounds = array<i64: 1, 32>}, {pipeline_mode = #tpu.pipeline_mode<synchronous>, transform_indices = @transform_7, window_bounds = array<i64: 32, 128>}, {pipeline_mode = #tpu.pipeline_mode<synchronous>, transform_indices = @transform_8, window_bounds = array<i64: 1, 128>}, {transform_indices = @transform_9, window_bounds = array<i64: 4, 8, 128>}]} {
    %c0 = arith.constant 0 : index
    %c0_0 = arith.constant 0 : index
    %c0_1 = arith.constant 0 : index
    %0 = vector.load %arg1[%c0, %c0_0, %c0_1] : memref<4x8x32xf32, #tpu.memory_space<vmem>>, vector<4x8x32xf32>
    %1 = vector.shape_cast %0 : vector<4x8x32xf32> to vector<32x32xf32>
    %c0_2 = arith.constant 0 : index
    %c0_3 = arith.constant 0 : index
    %2 = vector.load %arg2[%c0_2, %c0_3] : memref<32x96xf32, #tpu.memory_space<vmem>>, vector<32x96xf32>
    %cst = arith.constant dense<0.000000e+00> : vector<32x96xf32>
    %3 = tpu.matmul %1, %2, %cst {dimension_numbers = #tpu.dot_dimension_numbers<[1], [0], [0], [1], [0, 0, 1, 1], [], []>} : vector<32x32xf32>, vector<32x96xf32>, vector<32x96xf32> -> vector<32x96xf32>
    %c0_4 = arith.constant 0 : index
    %c0_5 = arith.constant 0 : index
    %4 = vector.load %arg3[%c0_4, %c0_5] : memref<1x96xf32, #tpu.memory_space<vmem>>, vector<1x96xf32>
    %5 = vector.broadcast %4 : vector<1x96xf32> to vector<32x96xf32>
    %6 = arith.addf %3, %5 : vector<32x96xf32>
    %7 = vector.shape_cast %6 : vector<32x96xf32> to vector<4x8x96xf32>
    %8 = vector.extract_strided_slice %7 {offsets = [0, 0, 0], sizes = [4, 8, 16], strides = [1, 1, 1]} : vector<4x8x96xf32> to vector<4x8x16xf32>
    %9 = vector.extract_strided_slice %7 {offsets = [0, 0, 32], sizes = [4, 8, 16], strides = [1, 1, 1]} : vector<4x8x96xf32> to vector<4x8x16xf32>
    %10 = vector.extract_strided_slice %7 {offsets = [0, 0, 64], sizes = [4, 8, 16], strides = [1, 1, 1]} : vector<4x8x96xf32> to vector<4x8x16xf32>
    "tpu.trace_start"() <{level = 10 : i32, message = "bqd,bkd->bqk"}> : () -> ()
    %cst_6 = arith.constant dense<0.000000e+00> : vector<4x8x8xf32>
    %11 = tpu.matmul %8, %9, %cst_6 {dimension_numbers = #tpu.dot_dimension_numbers<[2], [2], [1], [1], [0, 0, 0, 1, 1, 1], [0], [0]>} : vector<4x8x16xf32>, vector<4x8x16xf32>, vector<4x8x8xf32> -> vector<4x8x8xf32>
    "tpu.trace_stop"() : () -> ()
    %cst_7 = arith.constant 2.500000e-01 : f32
    %12 = vector.broadcast %cst_7 : f32 to vector<4x8x8xf32>
    %13 = arith.mulf %11, %12 : vector<4x8x8xf32>
    %cst_8 = arith.constant dense<0xFF800000> : vector<4x8xf32>
    %14 = vector.multi_reduction <maximumf>, %13, %cst_8 [2] : vector<4x8x8xf32> to vector<4x8xf32>
    %15 = vector.shape_cast %14 : vector<4x8xf32> to vector<4x8x1xf32>
    %16 = vector.broadcast %15 : vector<4x8x1xf32> to vector<4x8x8xf32>
    %17 = arith.subf %13, %16 : vector<4x8x8xf32>
    %18 = math.exp %17 : vector<4x8x8xf32>
    %cst_9 = arith.constant dense<0.000000e+00> : vector<4x8xf32>
    %19 = vector.multi_reduction <add>, %18, %cst_9 [2] : vector<4x8x8xf32> to vector<4x8xf32>
    %20 = vector.shape_cast %19 : vector<4x8xf32> to vector<4x8x1xf32>
    %21 = tpu.reciprocal %20 {approx = true} : vector<4x8x1xf32> -> vector<4x8x1xf32>
    %22 = vector.broadcast %21 : vector<4x8x1xf32> to vector<4x8x8xf32>
    %23 = arith.mulf %18, %22 : vector<4x8x8xf32>
    "tpu.trace_start"() <{level = 10 : i32, message = "bqk,bkd->bqd"}> : () -> ()
    %cst_10 = arith.constant dense<0.000000e+00> : vector<4x8x16xf32>
    %24 = tpu.matmul %23, %10, %cst_10 {dimension_numbers = #tpu.dot_dimension_numbers<[2], [1], [1], [2], [0, 0, 0, 1, 1, 2], [0], [0]>} : vector<4x8x8xf32>, vector<4x8x16xf32>, vector<4x8x16xf32> -> vector<4x8x16xf32>
    "tpu.trace_stop"() : () -> ()
    %25 = vector.extract_strided_slice %7 {offsets = [0, 0, 16], sizes = [4, 8, 16], strides = [1, 1, 1]} : vector<4x8x96xf32> to vector<4x8x16xf32>
    %26 = vector.extract_strided_slice %7 {offsets = [0, 0, 48], sizes = [4, 8, 16], strides = [1, 1, 1]} : vector<4x8x96xf32> to vector<4x8x16xf32>
    %27 = vector.extract_strided_slice %7 {offsets = [0, 0, 80], sizes = [4, 8, 16], strides = [1, 1, 1]} : vector<4x8x96xf32> to vector<4x8x16xf32>
    "tpu.trace_start"() <{level = 10 : i32, message = "bqd,bkd->bqk"}> : () -> ()
    %cst_11 = arith.constant dense<0.000000e+00> : vector<4x8x8xf32>
    %28 = tpu.matmul %25, %26, %cst_11 {dimension_numbers = #tpu.dot_dimension_numbers<[2], [2], [1], [1], [0, 0, 0, 1, 1, 1], [0], [0]>} : vector<4x8x16xf32>, vector<4x8x16xf32>, vector<4x8x8xf32> -> vector<4x8x8xf32>
    "tpu.trace_stop"() : () -> ()
    %cst_12 = arith.constant 2.500000e-01 : f32
    %29 = vector.broadcast %cst_12 : f32 to vector<4x8x8xf32>
    %30 = arith.mulf %28, %29 : vector<4x8x8xf32>
    %cst_13 = arith.constant dense<0xFF800000> : vector<4x8xf32>
    %31 = vector.multi_reduction <maximumf>, %30, %cst_13 [2] : vector<4x8x8xf32> to vector<4x8xf32>
    %32 = vector.shape_cast %31 : vector<4x8xf32> to vector<4x8x1xf32>
    %33 = vector.broadcast %32 : vector<4x8x1xf32> to vector<4x8x8xf32>
    %34 = arith.subf %30, %33 : vector<4x8x8xf32>
    %35 = math.exp %34 : vector<4x8x8xf32>
    %cst_14 = arith.constant dense<0.000000e+00> : vector<4x8xf32>
    %36 = vector.multi_reduction <add>, %35, %cst_14 [2] : vector<4x8x8xf32> to vector<4x8xf32>
    %37 = vector.shape_cast %36 : vector<4x8xf32> to vector<4x8x1xf32>
    %38 = tpu.reciprocal %37 {approx = true} : vector<4x8x1xf32> -> vector<4x8x1xf32>
    %39 = vector.broadcast %38 : vector<4x8x1xf32> to vector<4x8x8xf32>
    %40 = arith.mulf %35, %39 : vector<4x8x8xf32>
    "tpu.trace_start"() <{level = 10 : i32, message = "bqk,bkd->bqd"}> : () -> ()
    %cst_15 = arith.constant dense<0.000000e+00> : vector<4x8x16xf32>
    %41 = tpu.matmul %40, %27, %cst_15 {dimension_numbers = #tpu.dot_dimension_numbers<[2], [1], [1], [2], [0, 0, 0, 1, 1, 2], [0], [0]>} : vector<4x8x8xf32>, vector<4x8x16xf32>, vector<4x8x16xf32> -> vector<4x8x16xf32>
    "tpu.trace_stop"() : () -> ()
    %42 = tpu.concatenate %24, %41 in 2 : vector<4x8x16xf32>, vector<4x8x16xf32> -> vector<4x8x32xf32>
    %43 = vector.shape_cast %42 : vector<4x8x32xf32> to vector<32x32xf32>
    %c0_16 = arith.constant 0 : index
    %c0_17 = arith.constant 0 : index
    %44 = vector.load %arg4[%c0_16, %c0_17] : memref<32x32xf32, #tpu.memory_space<vmem>>, vector<32x32xf32>
    %cst_18 = arith.constant dense<0.000000e+00> : vector<32x32xf32>
    %45 = tpu.matmul %43, %44, %cst_18 {dimension_numbers = #tpu.dot_dimension_numbers<[1], [0], [0], [1], [0, 0, 1, 1], [], []>} : vector<32x32xf32>, vector<32x32xf32>, vector<32x32xf32> -> vector<32x32xf32>
    %c0_19 = arith.constant 0 : index
    %c0_20 = arith.constant 0 : index
    %46 = vector.load %arg5[%c0_19, %c0_20] : memref<1x32xf32, #tpu.memory_space<vmem>>, vector<1x32xf32>
    %47 = vector.broadcast %46 : vector<1x32xf32> to vector<32x32xf32>
    %48 = arith.addf %45, %47 : vector<32x32xf32>
    %49 = arith.addf %1, %48 : vector<32x32xf32>
    %cst_21 = arith.constant dense<0.000000e+00> : vector<32xf32>
    %50 = vector.multi_reduction <add>, %49, %cst_21 [1] : vector<32x32xf32> to vector<32xf32>
    %51 = vector.shape_cast %50 : vector<32xf32> to vector<32x1xf32>
    %cst_22 = arith.constant 3.200000e+01 : f32
    %52 = vector.broadcast %cst_22 : f32 to vector<32x1xf32>
    %53 = arith.divf %51, %52 : vector<32x1xf32>
    %54 = vector.broadcast %53 : vector<32x1xf32> to vector<32x32xf32>
    %55 = arith.subf %49, %54 : vector<32x32xf32>
    %56 = arith.mulf %55, %55 : vector<32x32xf32>
    %cst_23 = arith.constant dense<0.000000e+00> : vector<32xf32>
    %57 = vector.multi_reduction <add>, %56, %cst_23 [1] : vector<32x32xf32> to vector<32xf32>
    %58 = vector.shape_cast %57 : vector<32xf32> to vector<32x1xf32>
    %cst_24 = arith.constant 3.200000e+01 : f32
    %59 = vector.broadcast %cst_24 : f32 to vector<32x1xf32>
    %60 = arith.divf %58, %59 : vector<32x1xf32>
    %61 = vector.broadcast %53 : vector<32x1xf32> to vector<32x32xf32>
    %62 = arith.subf %49, %61 : vector<32x32xf32>
    %cst_25 = arith.constant 9.99999974E-6 : f32
    %63 = vector.broadcast %cst_25 : f32 to vector<32x1xf32>
    %64 = arith.addf %60, %63 : vector<32x1xf32>
    %65 = math.rsqrt %64 : vector<32x1xf32>
    %66 = vector.broadcast %65 : vector<32x1xf32> to vector<32x32xf32>
    %67 = arith.mulf %62, %66 : vector<32x32xf32>
    %c0_26 = arith.constant 0 : index
    %c0_27 = arith.constant 0 : index
    %68 = vector.load %arg6[%c0_26, %c0_27] : memref<1x32xf32, #tpu.memory_space<vmem>>, vector<1x32xf32>
    %69 = vector.broadcast %68 : vector<1x32xf32> to vector<32x32xf32>
    %70 = arith.mulf %67, %69 : vector<32x32xf32>
    %c0_28 = arith.constant 0 : index
    %c0_29 = arith.constant 0 : index
    %71 = vector.load %arg7[%c0_28, %c0_29] : memref<1x32xf32, #tpu.memory_space<vmem>>, vector<1x32xf32>
    %72 = vector.broadcast %71 : vector<1x32xf32> to vector<32x32xf32>
    %73 = arith.addf %70, %72 : vector<32x32xf32>
    %c0_30 = arith.constant 0 : index
    %c0_31 = arith.constant 0 : index
    %74 = vector.load %arg8[%c0_30, %c0_31] : memref<32x128xf32, #tpu.memory_space<vmem>>, vector<32x128xf32>
    %cst_32 = arith.constant dense<0.000000e+00> : vector<32x128xf32>
    %75 = tpu.matmul %73, %74, %cst_32 {dimension_numbers = #tpu.dot_dimension_numbers<[1], [0], [0], [1], [0, 0, 1, 1], [], []>} : vector<32x32xf32>, vector<32x128xf32>, vector<32x128xf32> -> vector<32x128xf32>
    %c0_33 = arith.constant 0 : index
    %c0_34 = arith.constant 0 : index
    %76 = vector.load %arg9[%c0_33, %c0_34] : memref<1x128xf32, #tpu.memory_space<vmem>>, vector<1x128xf32>
    %77 = vector.broadcast %76 : vector<1x128xf32> to vector<32x128xf32>
    %78 = arith.addf %75, %77 : vector<32x128xf32>
    %79 = vector.shape_cast %78 : vector<32x128xf32> to vector<4x8x128xf32>
    %c0_35 = arith.constant 0 : index
    %c0_36 = arith.constant 0 : index
    %c0_37 = arith.constant 0 : index
    %80 = vector.load %arg10[%c0_35, %c0_36, %c0_37] : memref<4x8x128xf32, #tpu.memory_space<vmem>>, vector<4x8x128xf32>
    tpu.vector_store %arg10[%c0_35, %c0_36, %c0_37], %79 {strides = array<i32>} : memref<4x8x128xf32, #tpu.memory_space<vmem>>, vector<4x8x128xf32>,
    return
  }
  func.func @transform_0(%arg0: i32) -> (i32, i32, i32) {
    %c0_i32 = arith.constant 0 : i32
    %c0_i32_0 = arith.constant 0 : i32
    %c0_i32_1 = arith.constant 0 : i32
    return %arg0, %c0_i32, %c0_i32_0 : i32, i32, i32
  }
  func.func @transform_1(%arg0: i32) -> (i32, i32) {
    %c0_i32 = arith.constant 0 : i32
    %c0_i32_0 = arith.constant 0 : i32
    %c0_i32_1 = arith.constant 0 : i32
    return %c0_i32, %c0_i32_0 : i32, i32
  }
  func.func @transform_2(%arg0: i32) -> (i32, i32) {
    %c0_i32 = arith.constant 0 : i32
    %c0_i32_0 = arith.constant 0 : i32
    %c0_i32_1 = arith.constant 0 : i32
    return %c0_i32, %c0_i32_0 : i32, i32
  }
  func.func @transform_3(%arg0: i32) -> (i32, i32) {
    %c0_i32 = arith.constant 0 : i32
    %c0_i32_0 = arith.constant 0 : i32
    %c0_i32_1 = arith.constant 0 : i32
    return %c0_i32, %c0_i32_0 : i32, i32
  }
  func.func @transform_4(%arg0: i32) -> (i32, i32) {
    %c0_i32 = arith.constant 0 : i32
    %c0_i32_0 = arith.constant 0 : i32
    %c0_i32_1 = arith.constant 0 : i32
    return %c0_i32, %c0_i32_0 : i32, i32
  }
  func.func @transform_5(%arg0: i32) -> (i32, i32) {
    %c0_i32 = arith.constant 0 : i32
    %c0_i32_0 = arith.constant 0 : i32
    %c0_i32_1 = arith.constant 0 : i32
    return %c0_i32, %c0_i32_0 : i32, i32
  }
  func.func @transform_6(%arg0: i32) -> (i32, i32) {
    %c0_i32 = arith.constant 0 : i32
    %c0_i32_0 = arith.constant 0 : i32
    %c0_i32_1 = arith.constant 0 : i32
    return %c0_i32, %c0_i32_0 : i32, i32
  }
  func.func @transform_7(%arg0: i32) -> (i32, i32) {
    %c0_i32 = arith.constant 0 : i32
    %c0_i32_0 = arith.constant 0 : i32
    %c0_i32_1 = arith.constant 0 : i32
    return %c0_i32, %c0_i32_0 : i32, i32
  }
  func.func @transform_8(%arg0: i32) -> (i32, i32) {
    %c0_i32 = arith.constant 0 : i32
    %c0_i32_0 = arith.constant 0 : i32
    %c0_i32_1 = arith.constant 0 : i32
    return %c0_i32, %c0_i32_0 : i32, i32
  }
  func.func @transform_9(%arg0: i32) -> (i32, i32, i32) {
    %c0_i32 = arith.constant 0 : i32
    %c0_i32_0 = arith.constant 0 : i32
    %c0_i32_1 = arith.constant 0 : i32
    return %arg0, %c0_i32, %c0_i32_0 : i32, i32, i32
  }
}

</mosaic_0001>

<llo_original>
// kernel: tpu_custom_call.1
$region0: #{tpu_custom_call.1}
  #allocation0 [shape = 'u32[]', space=smem, size = 0x4, offset = 0x4, fixed_abs, tag = 'smem constant byte address 0x4 - core index']
  #allocation1 [shape = 'u32[144,128]{1,0:T(1,128)}', space=vmem, size = 0x12000, scoped, tag = 'internal scratch']
  %s0 = inlined_call_operand.hbm [shape: f32[8,8,32], index: 0, kind: input, shape index: {}]
  %s1 = inlined_call_operand.hbm [shape: f32[32,96], index: 1, kind: input, shape index: {}]
  %s2 = inlined_call_operand.vmem [shape: f32[1,96], index: 2, kind: input, shape index: {}]
  %s3 = inlined_call_operand.hbm [shape: f32[32,32], index: 3, kind: input, shape index: {}]
  %s4 = inlined_call_operand.vmem [shape: f32[1,32], index: 4, kind: input, shape index: {}]
  %s5 = inlined_call_operand.vmem [shape: f32[1,32], index: 5, kind: input, shape index: {}]
  %s6 = inlined_call_operand.vmem [shape: f32[1,32], index: 6, kind: input, shape index: {}]
  %s7 = inlined_call_operand.hbm [shape: f32[32,128], index: 7, kind: input, shape index: {}]
  %s8 = inlined_call_operand.vmem [shape: f32[1,128], index: 8, kind: input, shape index: {}]
  %s9 = inlined_call_operand.hbm [shape: f32[8,8,128], index: 9, kind: output, shape index: {}]
  %s10 = sld [smem:[#allocation0]]
  $region85: #{tpu_custom_call.1} parent=0
    _
  %s12 = ssub.s32 1, %s10
  %s13 = scalar_select 0, %s12, %s10
  $region1: #{tpu_custom_call.1} parent=0
    #allocation2 [shape = 'u8[32768]{0}', space=vmem, size = 0x8000, scoped, tag = 'input window, operand 0']
    #allocation3 [shape = 's32[2]{0}', space=sflag, size = 0x8, scoped, tag = 'scoped memory for tpu_custom_call.1']
    #allocation4 [shape = 's32[2]{0}', space=sflag, size = 0x8, scoped, tag = 'scoped memory for tpu_custom_call.1']
    #allocation5 [shape = 'u8[16384]{0}', space=vmem, size = 0x4000, scoped, tag = 'input window, operand 1, single buffered']
    #allocation6 [shape = 's32[1]{0}', space=sflag, size = 0x4, scoped, tag = 'scoped memory for tpu_custom_call.1']
    #allocation7 [shape = 'u8[16384]{0}', space=vmem, size = 0x4000, scoped, tag = 'input window, operand 3, single buffered']
    #allocation8 [shape = 'u8[16384]{0}', space=vmem, size = 0x4000, scoped, tag = 'input window, operand 7, single buffered']
    #allocation9 [shape = 's32[1]{0}', space=sflag, size = 0x4, scoped, tag = 'scoped memory for tpu_custom_call.1']
    #allocation10 [shape = 'u8[32768]{0}', space=vmem, size = 0x8000, scoped, tag = 'output window, operand 0']
    %14 = vsyncpa [#allocation3], 0
    %s15 = scalar_lea.sflag [#allocation3], 1
    %16 = vsyncpa %s15, 0
    %17 = vsyncpa [#allocation6], 0
    %18 = vsyncpa [#allocation9], 0
    %19 = vsyncpa [#allocation4], 0
    %s20 = scalar_lea.sflag [#allocation4], 1
    %21 = vsyncpa %s20, 0
    loop: start=0, step=1, limit=4
    $region2: #{tpu_custom_call.1} parent=1 // loop_pre_header
      _
    $region3: #{tpu_custom_call.1} parent=1 // loop_header
      %s23 = sphi 0, %s27
      %p24 = scmp.ge.s32.totalorder %s23, 4
      %s33 = sphi 0, %s35
      %s36 = sphi 0, %s33
      %s37 = sphi 0, %s36
      %s53 = sphi 0, %s37
      %s57 = sphi 0, %s57
      %s59 = sphi 0, %s57
      %s60 = sphi 0, %s59
      %s74 = sphi 0, %s60
      %s78 = sphi 0, %s78
      %s80 = sphi 0, %s78
      %s81 = sphi 0, %s80
      %s95 = sphi 0, %s81
      %s99 = sphi 0, %s99
      %s101 = sphi 0, %s99
      %s102 = sphi 0, %s101
      %s116 = sphi 0, %s102
      %s120 = sphi 0, %s120
      %s122 = sphi 0, %s120
      %s123 = sphi 0, %s122
      %s137 = sphi 0, %s123
      %s141 = sphi 0, %s141
      %s143 = sphi 0, %s141
      %s144 = sphi 0, %s143
      %s158 = sphi 0, %s144
      %s162 = sphi 0, %s162
      %s164 = sphi 0, %s162
      %s165 = sphi 0, %s164
      %s179 = sphi 0, %s165
      %s183 = sphi 0, %s183
      %s185 = sphi 0, %s183
      %s186 = sphi 0, %s185
      %s200 = sphi 0, %s186
      %s204 = sphi 0, %s204
      %s206 = sphi 0, %s204
      %s207 = sphi 0, %s206
      %s221 = sphi 0, %s207
      %s227 = sphi 0, %s229
      %s230 = sphi 0, %s227
      %s231 = sphi 0, %s230
      %s247 = sphi 0, %s231
    $region4: #{tpu_custom_call.1} parent=1 // loop_header_branch
      %26 = sbr.rel (%p24) target = $region8
    $region5: #{tpu_custom_call.1} parent=1 // loop_body
      %s28 = ssub.s32 %s23, 1
      %s29 = ssub.s32 %s23, 2
      %s30 = sadd.s32 %s23, 1
      %s31 = ssub.s32 %s23, %s30
      %p32 = scmp.eq.s32.totalorder %s31, 0
      %s34 = sadd.s32 %s33, 1
      %s35 = scalar_select %p32, %s33, %s34
      %p38 = pneg %p32
      %p39 = scmp.eq.s32.totalorder %s23, 1
      %p40 = por %p38, %p39
      %p41 = scmp.ne.s32.totalorder %s33, %s36
      %p42 = scmp.eq.s32.totalorder %s23, 0
      %p43 = por %p41, %p42
      %p44 = scmp.ne.s32.totalorder %s33, %s36
      %p45 = scmp.eq.s32.totalorder %s28, 1
      %p46 = por %p44, %p45
      %p47 = scmp.ne.s32.totalorder %s36, %s37
      %p48 = scmp.eq.s32.totalorder %s28, 0
      %p49 = por %p47, %p48
      %p50 = scmp.ne.s32.totalorder %s36, %s37
      %p51 = scmp.eq.s32.totalorder %s29, 1
      %p52 = por %p50, %p51
      %p54 = scmp.ne.s32.totalorder %s37, %s53
      %p55 = scmp.eq.s32.totalorder %s29, 0
      %p56 = por %p54, %p55
      %s58 = sadd.s32 %s57, 1
      %p61 = scmp.eq.s32.totalorder %s23, 1
      %p62 = scmp.ne.s32.totalorder %s57, %s59
      %p63 = scmp.eq.s32.totalorder %s23, 0
      %p64 = por %p62, %p63
      %p65 = scmp.ne.s32.totalorder %s57, %s59
      %p66 = scmp.eq.s32.totalorder %s28, 1
      %p67 = por %p65, %p66
      %p68 = scmp.ne.s32.totalorder %s59, %s60
      %p69 = scmp.eq.s32.totalorder %s28, 0
      %p70 = por %p68, %p69
      %p71 = scmp.ne.s32.totalorder %s59, %s60
      %p72 = scmp.eq.s32.totalorder %s29, 1
      %p73 = por %p71, %p72
      %p75 = scmp.ne.s32.totalorder %s60, %s74
      %p76 = scmp.eq.s32.totalorder %s29, 0
      %p77 = por %p75, %p76
      %s79 = sadd.s32 %s78, 1
      %p82 = scmp.eq.s32.totalorder %s23, 1
      %p83 = scmp.ne.s32.totalorder %s78, %s80
      %p84 = scmp.eq.s32.totalorder %s23, 0
      %p85 = por %p83, %p84
      %p86 = scmp.ne.s32.totalorder %s78, %s80
      %p87 = scmp.eq.s32.totalorder %s28, 1
      %p88 = por %p86, %p87
      %p89 = scmp.ne.s32.totalorder %s80, %s81
      %p90 = scmp.eq.s32.totalorder %s28, 0
      %p91 = por %p89, %p90
      %p92 = scmp.ne.s32.totalorder %s80, %s81
      %p93 = scmp.eq.s32.totalorder %s29, 1
      %p94 = por %p92, %p93
      %p96 = scmp.ne.s32.totalorder %s81, %s95
      %p97 = scmp.eq.s32.totalorder %s29, 0
      %p98 = por %p96, %p97
      %s100 = sadd.s32 %s99, 1
      %p103 = scmp.eq.s32.totalorder %s23, 1
      %p104 = scmp.ne.s32.totalorder %s99, %s101
      %p105 = scmp.eq.s32.totalorder %s23, 0
      %p106 = por %p104, %p105
      %p107 = scmp.ne.s32.totalorder %s99, %s101
      %p108 = scmp.eq.s32.totalorder %s28, 1
      %p109 = por %p107, %p108
      %p110 = scmp.ne.s32.totalorder %s101, %s102
      %p111 = scmp.eq.s32.totalorder %s28, 0
      %p112 = por %p110, %p111
      %p113 = scmp.ne.s32.totalorder %s101, %s102
      %p114 = scmp.eq.s32.totalorder %s29, 1
      %p115 = por %p113, %p114
      %p117 = scmp.ne.s32.totalorder %s102, %s116
      %p118 = scmp.eq.s32.totalorder %s29, 0
      %p119 = por %p117, %p118
      %s121 = sadd.s32 %s120, 1
      %p124 = scmp.eq.s32.totalorder %s23, 1
      %p125 = scmp.ne.s32.totalorder %s120, %s122
      %p126 = scmp.eq.s32.totalorder %s23, 0
      %p127 = por %p125, %p126
      %p128 = scmp.ne.s32.totalorder %s120, %s122
      %p129 = scmp.eq.s32.totalorder %s28, 1
      %p130 = por %p128, %p129
      %p131 = scmp.ne.s32.totalorder %s122, %s123
      %p132 = scmp.eq.s32.totalorder %s28, 0
      %p133 = por %p131, %p132
      %p134 = scmp.ne.s32.totalorder %s122, %s123
      %p135 = scmp.eq.s32.totalorder %s29, 1
      %p136 = por %p134, %p135
      %p138 = scmp.ne.s32.totalorder %s123, %s137
      %p139 = scmp.eq.s32.totalorder %s29, 0
      %p140 = por %p138, %p139
      %s142 = sadd.s32 %s141, 1
      %p145 = scmp.eq.s32.totalorder %s23, 1
      %p146 = scmp.ne.s32.totalorder %s141, %s143
      %p147 = scmp.eq.s32.totalorder %s23, 0
      %p148 = por %p146, %p147
      %p149 = scmp.ne.s32.totalorder %s141, %s143
      %p150 = scmp.eq.s32.totalorder %s28, 1
      %p151 = por %p149, %p150
      %p152 = scmp.ne.s32.totalorder %s143, %s144
      %p153 = scmp.eq.s32.totalorder %s28, 0
      %p154 = por %p152, %p153
      %p155 = scmp.ne.s32.totalorder %s143, %s144
      %p156 = scmp.eq.s32.totalorder %s29, 1
      %p157 = por %p155, %p156
      %p159 = scmp.ne.s32.totalorder %s144, %s158
      %p160 = scmp.eq.s32.totalorder %s29, 0
      %p161 = por %p159, %p160
      %s163 = sadd.s32 %s162, 1
      %p166 = scmp.eq.s32.totalorder %s23, 1
      %p167 = scmp.ne.s32.totalorder %s162, %s164
      %p168 = scmp.eq.s32.totalorder %s23, 0
      %p169 = por %p167, %p168
      %p170 = scmp.ne.s32.totalorder %s162, %s164
      %p171 = scmp.eq.s32.totalorder %s28, 1
      %p172 = por %p170, %p171
      %p173 = scmp.ne.s32.totalorder %s164, %s165
      %p174 = scmp.eq.s32.totalorder %s28, 0
      %p175 = por %p173, %p174
      %p176 = scmp.ne.s32.totalorder %s164, %s165
      %p177 = scmp.eq.s32.totalorder %s29, 1
      %p178 = por %p176, %p177
      %p180 = scmp.ne.s32.totalorder %s165, %s179
      %p181 = scmp.eq.s32.totalorder %s29, 0
      %p182 = por %p180, %p181
      %s184 = sadd.s32 %s183, 1
      %p187 = scmp.eq.s32.totalorder %s23, 1
      %p188 = scmp.ne.s32.totalorder %s183, %s185
      %p189 = scmp.eq.s32.totalorder %s23, 0
      %p190 = por %p188, %p189
      %p191 = scmp.ne.s32.totalorder %s183, %s185
      %p192 = scmp.eq.s32.totalorder %s28, 1
      %p193 = por %p191, %p192
      %p194 = scmp.ne.s32.totalorder %s185, %s186
      %p195 = scmp.eq.s32.totalorder %s28, 0
      %p196 = por %p194, %p195
      %p197 = scmp.ne.s32.totalorder %s185, %s186
      %p198 = scmp.eq.s32.totalorder %s29, 1
      %p199 = por %p197, %p198
      %p201 = scmp.ne.s32.totalorder %s186, %s200
      %p202 = scmp.eq.s32.totalorder %s29, 0
      %p203 = por %p201, %p202
      %s205 = sadd.s32 %s204, 1
      %p208 = scmp.eq.s32.totalorder %s23, 1
      %p209 = scmp.ne.s32.totalorder %s204, %s206
      %p210 = scmp.eq.s32.totalorder %s23, 0
      %p211 = por %p209, %p210
      %p212 = scmp.ne.s32.totalorder %s204, %s206
      %p213 = scmp.eq.s32.totalorder %s28, 1
      %p214 = por %p212, %p213
      %p215 = scmp.ne.s32.totalorder %s206, %s207
      %p216 = scmp.eq.s32.totalorder %s28, 0
      %p217 = por %p215, %p216
      %p218 = scmp.ne.s32.totalorder %s206, %s207
      %p219 = scmp.eq.s32.totalorder %s29, 1
      %p220 = por %p218, %p219
      %p222 = scmp.ne.s32.totalorder %s207, %s221
      %p223 = scmp.eq.s32.totalorder %s29, 0
      %p224 = por %p222, %p223
      %s225 = ssub.s32 %s23, %s30
      %p226 = scmp.eq.s32.totalorder %s225, 0
      %s228 = sadd.s32 %s227, 1
      %s229 = scalar_select %p226, %s227, %s228
      %p232 = pneg %p226
      %p233 = scmp.eq.s32.totalorder %s23, 1
      %p234 = por %p232, %p233
      %p235 = scmp.ne.s32.totalorder %s227, %s230
      %p236 = scmp.eq.s32.totalorder %s23, 0
      %p237 = por %p235, %p236
      %p238 = scmp.ne.s32.totalorder %s227, %s230
      %p239 = scmp.eq.s32.totalorder %s28, 1
      %p240 = por %p238, %p239
      %p241 = scmp.ne.s32.totalorder %s230, %s231
      %p242 = scmp.eq.s32.totalorder %s28, 0
      %p243 = por %p241, %p242
      %p244 = scmp.ne.s32.totalorder %s230, %s231
      %p245 = scmp.eq.s32.totalorder %s29, 1
      %p246 = por %p244, %p245
      %p248 = scmp.ne.s32.totalorder %s231, %s247
      %p249 = scmp.eq.s32.totalorder %s29, 0
      %p250 = por %p248, %p249
      %p251 = scmp.le.s32.totalorder 1, %s23
      %p252 = scmp.lt.s32.totalorder %s23, 3
      %p253 = pnand %p251, %p252
      %p254 = pneg %p253
      // Predicated region
      $region9: #{tpu_custom_call.1} parent=5 // pred_check
        _
      $region10: #{tpu_custom_call.1} parent=5 // pred_check_branch
        %256 = sbr.rel (%p253) target = $region12
      $region11: #{tpu_custom_call.1} parent=5 // pred_region
        %s257 = ssub.s32 %s23, 1
        // Predicated region
        $region13: #{tpu_custom_call.1} parent=11 // pred_check
          %p258 = pneg %p70
        $region14: #{tpu_custom_call.1} parent=11 // pred_check_branch
          %260 = sbr.rel (%p258) target = $region16
        $region15: #{tpu_custom_call.1} parent=11 // pred_region
          %s262 = ssub.s32 512, 512
          %263 = vsyncadd [#allocation6], %s262
          %s264 = sshll.u32 [#allocation5], 4
          %s265 = int_to_ptr.vmem [resolvable:$true] %s264
          %270 = dma.hbm_to_vmem [thread:$0]  %s1, 512, %s265, [#allocation6], 128, 128, 8
        $region16: #{tpu_custom_call.1} parent=11 // pred_fallthru
          _
        // Predicated region
        $region17: #{tpu_custom_call.1} parent=11 // pred_check
          %p271 = pneg %p91
        $region18: #{tpu_custom_call.1} parent=11 // pred_check_branch
          %273 = sbr.rel (%p271) target = $region20
        $region19: #{tpu_custom_call.1} parent=11 // pred_region
          _
        $region20: #{tpu_custom_call.1} parent=11 // pred_fallthru
          _
        // Predicated region
        $region21: #{tpu_custom_call.1} parent=11 // pred_check
          %p274 = pneg %p112
        $region22: #{tpu_custom_call.1} parent=11 // pred_check_branch
          %276 = sbr.rel (%p274) target = $region24
        $region23: #{tpu_custom_call.1} parent=11 // pred_region
          %s278 = ssub.s32 512, 512
          %279 = vsyncadd [#allocation6], %s278
          %s280 = sshll.u32 [#allocation7], 4
          %s281 = int_to_ptr.vmem [resolvable:$true] %s280
          %286 = dma.hbm_to_vmem [thread:$0]  %s3, 512, %s281, [#allocation6], 128, 128, 8
        $region24: #{tpu_custom_call.1} parent=11 // pred_fallthru
          _
        // Predicated region
        $region25: #{tpu_custom_call.1} parent=11 // pred_check
          %p287 = pneg %p133
        $region26: #{tpu_custom_call.1} parent=11 // pred_check_branch
          %289 = sbr.rel (%p287) target = $region28
        $region27: #{tpu_custom_call.1} parent=11 // pred_region
          _
        $region28: #{tpu_custom_call.1} parent=11 // pred_fallthru
          _
        // Predicated region
        $region29: #{tpu_custom_call.1} parent=11 // pred_check
          %p290 = pneg %p154
        $region30: #{tpu_custom_call.1} parent=11 // pred_check_branch
          %292 = sbr.rel (%p290) target = $region32
        $region31: #{tpu_custom_call.1} parent=11 // pred_region
          _
        $region32: #{tpu_custom_call.1} parent=11 // pred_fallthru
          _
        // Predicated region
        $region33: #{tpu_custom_call.1} parent=11 // pred_check
          %p293 = pneg %p175
        $region34: #{tpu_custom_call.1} parent=11 // pred_check_branch
          %295 = sbr.rel (%p293) target = $region36
        $region35: #{tpu_custom_call.1} parent=11 // pred_region
          _
        $region36: #{tpu_custom_call.1} parent=11 // pred_fallthru
          _
        // Predicated region
        $region37: #{tpu_custom_call.1} parent=11 // pred_check
          %p296 = pneg %p196
        $region38: #{tpu_custom_call.1} parent=11 // pred_check_branch
          %298 = sbr.rel (%p296) target = $region40
        $region39: #{tpu_custom_call.1} parent=11 // pred_region
          %s300 = ssub.s32 512, 512
          %301 = vsyncadd [#allocation9], %s300
          %s302 = sshll.u32 [#allocation8], 4
          %s303 = int_to_ptr.vmem [resolvable:$true] %s302
          %308 = dma.hbm_to_vmem [thread:$0]  %s7, 512, %s303, [#allocation9], 128, 128, 8
        $region40: #{tpu_custom_call.1} parent=11 // pred_fallthru
          _
        // Predicated region
        $region41: #{tpu_custom_call.1} parent=11 // pred_check
          %p309 = pneg %p217
        $region42: #{tpu_custom_call.1} parent=11 // pred_check_branch
          %311 = sbr.rel (%p309) target = $region44
        $region43: #{tpu_custom_call.1} parent=11 // pred_region
          _
        $region44: #{tpu_custom_call.1} parent=11 // pred_fallthru
          _
      $region12: #{tpu_custom_call.1} parent=5 // pred_fallthru
        _
      %p312 = scmp.lt.s32.totalorder %s23, 2
      // Predicated region
      $region45: #{tpu_custom_call.1} parent=5 // pred_check
        %p313 = pneg %p312
      $region46: #{tpu_custom_call.1} parent=5 // pred_check_branch
        %315 = sbr.rel (%p313) target = $region48
      $region47: #{tpu_custom_call.1} parent=5 // pred_region
        // Predicated region
        $region49: #{tpu_custom_call.1} parent=47 // pred_check
          %p316 = pneg %p43
        $region50: #{tpu_custom_call.1} parent=47 // pred_check_branch
          %318 = sbr.rel (%p316) target = $region52
        $region51: #{tpu_custom_call.1} parent=47 // pred_region
          %s319 = sand.u32 %s33, 1
          %s320 = scalar_lea.sflag [#allocation3], %s319
          %s321 = sand.u32 %s33, 1
          %s322 = smul.addr %s321, 32
          %s323 = scalar_lea.vmem [#allocation2], %s322
          %s324 = smul.u32 4, %s23
          %s326 = ssub.s32 512, 512
          %327 = vsyncadd %s320, %s326
          %s328 = smul.addr %s324, 128
          %s329 = scalar_lea.hbm %s0, %s328
          %s330 = sshll.u32 %s323, 4
          %s331 = int_to_ptr.vmem [resolvable:$true] %s330
          %336 = dma.hbm_to_vmem [thread:$0]  %s329, 512, %s331, %s320, 128, 128, 8
        $region52: #{tpu_custom_call.1} parent=47 // pred_fallthru
          _
      $region48: #{tpu_custom_call.1} parent=5 // pred_fallthru
        _
      %p337 = scmp.le.s32.totalorder 1, %s23
      %p338 = scmp.lt.s32.totalorder %s23, 3
      %p339 = pnand %p337, %p338
      %p340 = pneg %p339
      // Predicated region
      $region53: #{tpu_custom_call.1} parent=5 // pred_check
        _
      $region54: #{tpu_custom_call.1} parent=5 // pred_check_branch
        %342 = sbr.rel (%p339) target = $region56
      $region55: #{tpu_custom_call.1} parent=5 // pred_region
        %s343 = ssub.s32 %s23, 1
        %s344 = sand.u32 %s36, 1
        %s345 = scalar_lea.sflag [#allocation3], %s344
        %s346 = sand.u32 %s36, 1
        %s347 = smul.addr %s346, 32
        %s348 = scalar_lea.vmem [#allocation2], %s347
        // Predicated region
        $region57: #{tpu_custom_call.1} parent=55 // pred_check
          %p349 = pneg %p49
        $region58: #{tpu_custom_call.1} parent=55 // pred_check_branch
          %351 = sbr.rel (%p349) target = $region60
        $region59: #{tpu_custom_call.1} parent=55 // pred_region
          %352 = dma.done %s345, 512
        $region60: #{tpu_custom_call.1} parent=55 // pred_fallthru
          _
        // Predicated region
        $region61: #{tpu_custom_call.1} parent=55 // pred_check
          %p353 = pneg %p70
        $region62: #{tpu_custom_call.1} parent=55 // pred_check_branch
          %355 = sbr.rel (%p353) target = $region64
        $region63: #{tpu_custom_call.1} parent=55 // pred_region
          %356 = dma.done [#allocation6], 512
        $region64: #{tpu_custom_call.1} parent=55 // pred_fallthru
          _
        // Predicated region
        $region65: #{tpu_custom_call.1} parent=55 // pred_check
          %p357 = pneg %p112
        $region66: #{tpu_custom_call.1} parent=55 // pred_check_branch
          %359 = sbr.rel (%p357) target = $region68
        $region67: #{tpu_custom_call.1} parent=55 // pred_region
          %360 = dma.done [#allocation6], 512
        $region68: #{tpu_custom_call.1} parent=55 // pred_fallthru
          _
        // Predicated region
        $region69: #{tpu_custom_call.1} parent=55 // pred_check
          %p361 = pneg %p196
        $region70: #{tpu_custom_call.1} parent=55 // pred_check_branch
          %363 = sbr.rel (%p361) target = $region72
        $region71: #{tpu_custom_call.1} parent=55 // pred_region
          %364 = dma.done [#allocation9], 512
        $region72: #{tpu_custom_call.1} parent=55 // pred_fallthru
          _
        %s365 = sand.u32 %s36, 1
        %s366 = scalar_lea.sflag [#allocation3], %s365
        %s367 = sand.u32 %s36, 1
        %s368 = smul.addr %s367, 32
        %s369 = scalar_lea.vmem [#allocation2], %s368
        %p370 = pneg %p49
        %p371 = pneg %p46
        %p372 = pneg %p70
        %p373 = pneg %p67
        %p374 = pneg %p91
        %p375 = pneg %p88
        %p376 = pneg %p112
        %p377 = pneg %p109
        %p378 = pneg %p133
        %p379 = pneg %p130
        %p380 = pneg %p154
        %p381 = pneg %p151
        %p382 = pneg %p175
        %p383 = pneg %p172
        %p384 = pneg %p196
        %p385 = pneg %p193
        %p386 = pneg %p217
        %p387 = pneg %p214
        %p388 = pneg %p243
        %p389 = pneg %p240
        %s390 = sand.u32 %s230, 1
        %s391 = scalar_lea.sflag [#allocation4], %s390
        %s392 = sand.u32 %s230, 1
        %s393 = smul.addr %s392, 32
        %s394 = scalar_lea.vmem [#allocation10], %s393
        %s395 = smul.u32 4, %s28
        %s396 = smul.u32 4, %s28
        %v397 = vld [vmem:[%s348] sm:$0xff]
        %v398 = vld [vmem:[%s348 + $0x8] sm:$0xff]
        %v399 = vld [vmem:[%s348 + $0x10] sm:$0xff]
        %v400 = vld [vmem:[%s348 + $0x18] sm:$0xff]
        %v401 = vld [vmem:[#allocation5] sm:$0xff]
        %v402 = vld [vmem:[#allocation5 + $0x8] sm:$0xff]
        %v403 = vld [vmem:[#allocation5 + $0x10] sm:$0xff]
        %v404 = vld [vmem:[#allocation5 + $0x18] sm:$0xff]
        %v405 = vld [vmem:[%s2] sm:$0x1]
        %v407 = vlaneseq
        %v408 = vshrl.u32 %v407, 7
        %v409 = vsub.s32 0, %v408
        %v410 = vrot.slane %v405, %v409
        %vm412 = vcmask 261120
        %v414 = vsel %vm412, %v397, 0
        %v417 = vsel %vm412, %v398, 0
        %v420 = vsel %vm412, %v399, 0
        %v423 = vsel %vm412, %v400, 0
        %425 = vmatprep.subr.mxu0 0.0
        %426 = vmatpush1.msra.mxu0 0.0
        %427 = vmatprep.subr.mxu0 0.0
        %428 = vmatpush1.msra.mxu0 0.0
        %429 = vmatprep.subr.mxu0 0.0
        %430 = vmatpush1.msra.mxu0 0.0
        %431 = vmatprep.subr.mxu0 0.0
        %432 = vmatpush1.msra.mxu0 0.0
        %433 = vmatprep.subr.mxu0 0.0
        %434 = vmatpush1.msra.mxu0 0.0
        %435 = vmatprep.subr.mxu0 0.0
        %436 = vmatpush1.msra.mxu0 0.0
        %437 = vmatprep.subr.mxu0 0.0
        %438 = vmatpush1.msra.mxu0 0.0
        %439 = vmatprep.subr.mxu0 0.0
        %440 = vmatpush1.msra.mxu0 0.0
        %441 = vmatprep.subr.mxu0 0.0
        %442 = vmatpush1.msra.mxu0 0.0
        %443 = vmatprep.subr.mxu0 0.0
        %444 = vmatpush1.msra.mxu0 0.0
        %445 = vmatprep.subr.mxu0 0.0
        %446 = vmatpush1.msra.mxu0 0.0
        %447 = vmatprep.subr.mxu0 0.0
        %448 = vmatpush1.msra.mxu0 0.0
        %449 = vmatprep.subr.mxu0 0.0
        %450 = vmatpush1.msra.mxu0 %v404
        %451 = vmatprep.subr.mxu0 0.0
        %452 = vmatpush1.msra.mxu0 %v403
        %453 = vmatprep.subr.mxu0 0.0
        %454 = vmatpush1.msra.mxu0 %v402
        %455 = vmatprep.subr.mxu0 0.0
        %456 = vmatpush1.msra.mxu0 %v401
        %457 = vmatprep.subr.mxu0 0.0
        %458 = vmatpush2.msra.mxu0 0.0
        %459 = vmatprep.subr.mxu0 0.0
        %460 = vmatpush2.msra.mxu0 0.0
        %461 = vmatprep.subr.mxu0 0.0
        %462 = vmatpush2.msra.mxu0 0.0
        %463 = vmatprep.subr.mxu0 0.0
        %464 = vmatpush2.msra.mxu0 0.0
        %465 = vmatprep.subr.mxu0 0.0
        %466 = vmatpush2.msra.mxu0 0.0
        %467 = vmatprep.subr.mxu0 0.0
        %468 = vmatpush2.msra.mxu0 0.0
        %469 = vmatprep.subr.mxu0 0.0
        %470 = vmatpush2.msra.mxu0 0.0
        %471 = vmatprep.subr.mxu0 0.0
        %472 = vmatpush2.msra.mxu0 0.0
        %473 = vmatprep.subr.mxu0 0.0
        %474 = vmatpush2.msra.mxu0 0.0
        %475 = vmatprep.subr.mxu0 0.0
        %476 = vmatpush2.msra.mxu0 0.0
        %477 = vmatprep.subr.mxu0 0.0
        %478 = vmatpush2.msra.mxu0 0.0
        %479 = vmatprep.subr.mxu0 0.0
        %480 = vmatpush2.msra.mxu0 0.0
        %481 = vmatprep.subr.mxu0 0.0
        %482 = vmatpush2.msra.mxu0 0.0
        %483 = vmatprep.subr.mxu0 0.0
        %484 = vmatpush2.msra.mxu0 0.0
        %485 = vmatprep.subr.mxu0 0.0
        %486 = vmatpush2.msra.mxu0 0.0
        %487 = vmatprep.subr.mxu0 0.0
        %488 = vmatpush2.msra.mxu0 0.0
        %489 = vmatprep.mubr.f32.mxu0 0.0
        %490 = vmatmul.mubr.f32.gmra.mxu0 %v414
        %v491 = vpop.f32.mrf.mxu0
        %v492 = vadd.f32 %v410, %v491
        %v493 = vpop.f32.mrf.mxu0
        %494 = vmatprep.mubr.f32.mxu0 0.0
        %495 = vmatmul.mubr.f32.gmra.mxu0 %v417
        %v496 = vpop.f32.mrf.mxu0
        %v497 = vadd.f32 %v410, %v496
        %v498 = vpop.f32.mrf.mxu0
        %499 = vmatprep.mubr.f32.mxu0 0.0
        %500 = vmatmul.mubr.f32.gmra.mxu0 %v420
        %v501 = vpop.f32.mrf.mxu0
        %v502 = vadd.f32 %v410, %v501
        %v503 = vpop.f32.mrf.mxu0
        %504 = vmatprep.mubr.f32.mxu0 0.0
        %505 = vmatmul.mubr.f32.gmra.mxu0 %v423
        %v506 = vpop.f32.mrf.mxu0
        %v507 = vadd.f32 %v410, %v506
        %v508 = vpop.f32.mrf.mxu0
        %509 = vdwg.mxu0
        %511 = vrot.lane.b32.xlu0 %v492, 96
        %v512 = vpop.permute.xlu0 %511
        %vm513 = vcmask 130048
        %v514 = vsel %vm513, %v492, 0
        %v516 = vsel %vm513, %v512, 0
        %518 = vmatprep.subr.mxu0 0.0
        %519 = vmatpush1.xpose.msra.mxu0 0.0
        %520 = vmatprep.subr.mxu0 0.0
        %521 = vmatpush1.xpose.msra.mxu0 0.0
        %522 = vmatprep.subr.mxu0 0.0
        %523 = vmatpush1.xpose.msra.mxu0 0.0
        %524 = vmatprep.subr.mxu0 0.0
        %525 = vmatpush1.xpose.msra.mxu0 0.0
        %526 = vmatprep.subr.mxu0 0.0
        %527 = vmatpush1.xpose.msra.mxu0 0.0
        %528 = vmatprep.subr.mxu0 0.0
        %529 = vmatpush1.xpose.msra.mxu0 0.0
        %530 = vmatprep.subr.mxu0 0.0
        %531 = vmatpush1.xpose.msra.mxu0 0.0
        %532 = vmatprep.subr.mxu0 0.0
        %533 = vmatpush1.xpose.msra.mxu0 0.0
        %534 = vmatprep.subr.mxu0 0.0
        %535 = vmatpush1.xpose.msra.mxu0 0.0
        %536 = vmatprep.subr.mxu0 0.0
        %537 = vmatpush1.xpose.msra.mxu0 0.0
        %538 = vmatprep.subr.mxu0 0.0
        %539 = vmatpush1.xpose.msra.mxu0 0.0
        %540 = vmatprep.subr.mxu0 0.0
        %541 = vmatpush1.xpose.msra.mxu0 0.0
        %542 = vmatprep.subr.mxu0 0.0
        %543 = vmatpush1.xpose.msra.mxu0 0.0
        %544 = vmatprep.subr.mxu0 0.0
        %545 = vmatpush1.xpose.msra.mxu0 0.0
        %546 = vmatprep.subr.mxu0 0.0
        %547 = vmatpush1.xpose.msra.mxu0 0.0
        %548 = vmatprep.subr.mxu0 0.0
        %549 = vmatpush1.xpose.msra.mxu0 %v516
        %550 = vmatprep.subr.mxu0 0.0
        %551 = vmatpush2.xpose.msra.mxu0 0.0
        %552 = vmatprep.subr.mxu0 0.0
        %553 = vmatpush2.xpose.msra.mxu0 0.0
        %554 = vmatprep.subr.mxu0 0.0
        %555 = vmatpush2.xpose.msra.mxu0 0.0
        %556 = vmatprep.subr.mxu0 0.0
        %557 = vmatpush2.xpose.msra.mxu0 0.0
        %558 = vmatprep.subr.mxu0 0.0
        %559 = vmatpush2.xpose.msra.mxu0 0.0
        %560 = vmatprep.subr.mxu0 0.0
        %561 = vmatpush2.xpose.msra.mxu0 0.0
        %562 = vmatprep.subr.mxu0 0.0
        %563 = vmatpush2.xpose.msra.mxu0 0.0
        %564 = vmatprep.subr.mxu0 0.0
        %565 = vmatpush2.xpose.msra.mxu0 0.0
        %566 = vmatprep.subr.mxu0 0.0
        %567 = vmatpush2.xpose.msra.mxu0 0.0
        %568 = vmatprep.subr.mxu0 0.0
        %569 = vmatpush2.xpose.msra.mxu0 0.0
        %570 = vmatprep.subr.mxu0 0.0
        %571 = vmatpush2.xpose.msra.mxu0 0.0
        %572 = vmatprep.subr.mxu0 0.0
        %573 = vmatpush2.xpose.msra.mxu0 0.0
        %574 = vmatprep.subr.mxu0 0.0
        %575 = vmatpush2.xpose.msra.mxu0 0.0
        %576 = vmatprep.subr.mxu0 0.0
        %577 = vmatpush2.xpose.msra.mxu0 0.0
        %578 = vmatprep.subr.mxu0 0.0
        %579 = vmatpush2.xpose.msra.mxu0 0.0
        %580 = vmatprep.subr.mxu0 0.0
        %581 = vmatpush2.xpose.msra.mxu0 0.0
        %582 = vmatprep.mubr.f32.mxu0 0.0
        %583 = vmatmul.mubr.f32.gmra.mxu0 %v514
        %v584 = vpop.f32.mrf.mxu0
        %v585 = vadd.f32 0.0, %v584
        %v586 = vpop.f32.mrf.mxu0
        %587 = vdwg.mxu0
        %589 = vrot.lane.b32.xlu0 %v497, 96
        %v590 = vpop.permute.xlu0 %589
        %v591 = vsel %vm513, %v497, 0
        %v593 = vsel %vm513, %v590, 0
        %595 = vmatprep.subr.mxu0 0.0
        %596 = vmatpush1.xpose.msra.mxu0 0.0
        %597 = vmatprep.subr.mxu0 0.0
        %598 = vmatpush1.xpose.msra.mxu0 0.0
        %599 = vmatprep.subr.mxu0 0.0
        %600 = vmatpush1.xpose.msra.mxu0 0.0
        %601 = vmatprep.subr.mxu0 0.0
        %602 = vmatpush1.xpose.msra.mxu0 0.0
        %603 = vmatprep.subr.mxu0 0.0
        %604 = vmatpush1.xpose.msra.mxu0 0.0
        %605 = vmatprep.subr.mxu0 0.0
        %606 = vmatpush1.xpose.msra.mxu0 0.0
        %607 = vmatprep.subr.mxu0 0.0
        %608 = vmatpush1.xpose.msra.mxu0 0.0
        %609 = vmatprep.subr.mxu0 0.0
        %610 = vmatpush1.xpose.msra.mxu0 0.0
        %611 = vmatprep.subr.mxu0 0.0
        %612 = vmatpush1.xpose.msra.mxu0 0.0
        %613 = vmatprep.subr.mxu0 0.0
        %614 = vmatpush1.xpose.msra.mxu0 0.0
        %615 = vmatprep.subr.mxu0 0.0
        %616 = vmatpush1.xpose.msra.mxu0 0.0
        %617 = vmatprep.subr.mxu0 0.0
        %618 = vmatpush1.xpose.msra.mxu0 0.0
        %619 = vmatprep.subr.mxu0 0.0
        %620 = vmatpush1.xpose.msra.mxu0 0.0
        %621 = vmatprep.subr.mxu0 0.0
        %622 = vmatpush1.xpose.msra.mxu0 0.0
        %623 = vmatprep.subr.mxu0 0.0
        %624 = vmatpush1.xpose.msra.mxu0 0.0
        %625 = vmatprep.subr.mxu0 0.0
        %626 = vmatpush1.xpose.msra.mxu0 %v593
        %627 = vmatprep.subr.mxu0 0.0
        %628 = vmatpush2.xpose.msra.mxu0 0.0
        %629 = vmatprep.subr.mxu0 0.0
        %630 = vmatpush2.xpose.msra.mxu0 0.0
        %631 = vmatprep.subr.mxu0 0.0
        %632 = vmatpush2.xpose.msra.mxu0 0.0
        %633 = vmatprep.subr.mxu0 0.0
        %634 = vmatpush2.xpose.msra.mxu0 0.0
        %635 = vmatprep.subr.mxu0 0.0
        %636 = vmatpush2.xpose.msra.mxu0 0.0
        %637 = vmatprep.subr.mxu0 0.0
        %638 = vmatpush2.xpose.msra.mxu0 0.0
        %639 = vmatprep.subr.mxu0 0.0
        %640 = vmatpush2.xpose.msra.mxu0 0.0
        %641 = vmatprep.subr.mxu0 0.0
        %642 = vmatpush2.xpose.msra.mxu0 0.0
        %643 = vmatprep.subr.mxu0 0.0
        %644 = vmatpush2.xpose.msra.mxu0 0.0
        %645 = vmatprep.subr.mxu0 0.0
        %646 = vmatpush2.xpose.msra.mxu0 0.0
        %647 = vmatprep.subr.mxu0 0.0
        %648 = vmatpush2.xpose.msra.mxu0 0.0
        %649 = vmatprep.subr.mxu0 0.0
        %650 = vmatpush2.xpose.msra.mxu0 0.0
        %651 = vmatprep.subr.mxu0 0.0
        %652 = vmatpush2.xpose.msra.mxu0 0.0
        %653 = vmatprep.subr.mxu0 0.0
        %654 = vmatpush2.xpose.msra.mxu0 0.0
        %655 = vmatprep.subr.mxu0 0.0
        %656 = vmatpush2.xpose.msra.mxu0 0.0
        %657 = vmatprep.subr.mxu0 0.0
        %658 = vmatpush2.xpose.msra.mxu0 0.0
        %659 = vmatprep.mubr.f32.mxu0 0.0
        %660 = vmatmul.mubr.f32.gmra.mxu0 %v591
        %v661 = vpop.f32.mrf.mxu0
        %v662 = vadd.f32 0.0, %v661
        %v663 = vpop.f32.mrf.mxu0
        %664 = vdwg.mxu0
        %666 = vrot.lane.b32.xlu0 %v502, 96
        %v667 = vpop.permute.xlu0 %666
        %v668 = vsel %vm513, %v502, 0
        %v670 = vsel %vm513, %v667, 0
        %672 = vmatprep.subr.mxu0 0.0
        %673 = vmatpush1.xpose.msra.mxu0 0.0
        %674 = vmatprep.subr.mxu0 0.0
        %675 = vmatpush1.xpose.msra.mxu0 0.0
        %676 = vmatprep.subr.mxu0 0.0
        %677 = vmatpush1.xpose.msra.mxu0 0.0
        %678 = vmatprep.subr.mxu0 0.0
        %679 = vmatpush1.xpose.msra.mxu0 0.0
        %680 = vmatprep.subr.mxu0 0.0
        %681 = vmatpush1.xpose.msra.mxu0 0.0
        %682 = vmatprep.subr.mxu0 0.0
        %683 = vmatpush1.xpose.msra.mxu0 0.0
        %684 = vmatprep.subr.mxu0 0.0
        %685 = vmatpush1.xpose.msra.mxu0 0.0
        %686 = vmatprep.subr.mxu0 0.0
        %687 = vmatpush1.xpose.msra.mxu0 0.0
        %688 = vmatprep.subr.mxu0 0.0
        %689 = vmatpush1.xpose.msra.mxu0 0.0
        %690 = vmatprep.subr.mxu0 0.0
        %691 = vmatpush1.xpose.msra.mxu0 0.0
        %692 = vmatprep.subr.mxu0 0.0
        %693 = vmatpush1.xpose.msra.mxu0 0.0
        %694 = vmatprep.subr.mxu0 0.0
        %695 = vmatpush1.xpose.msra.mxu0 0.0
        %696 = vmatprep.subr.mxu0 0.0
        %697 = vmatpush1.xpose.msra.mxu0 0.0
        %698 = vmatprep.subr.mxu0 0.0
        %699 = vmatpush1.xpose.msra.mxu0 0.0
        %700 = vmatprep.subr.mxu0 0.0
        %701 = vmatpush1.xpose.msra.mxu0 0.0
        %702 = vmatprep.subr.mxu0 0.0
        %703 = vmatpush1.xpose.msra.mxu0 %v670
        %704 = vmatprep.subr.mxu0 0.0
        %705 = vmatpush2.xpose.msra.mxu0 0.0
        %706 = vmatprep.subr.mxu0 0.0
        %707 = vmatpush2.xpose.msra.mxu0 0.0
        %708 = vmatprep.subr.mxu0 0.0
        %709 = vmatpush2.xpose.msra.mxu0 0.0
        %710 = vmatprep.subr.mxu0 0.0
        %711 = vmatpush2.xpose.msra.mxu0 0.0
        %712 = vmatprep.subr.mxu0 0.0
        %713 = vmatpush2.xpose.msra.mxu0 0.0
        %714 = vmatprep.subr.mxu0 0.0
        %715 = vmatpush2.xpose.msra.mxu0 0.0
        %716 = vmatprep.subr.mxu0 0.0
        %717 = vmatpush2.xpose.msra.mxu0 0.0
        %718 = vmatprep.subr.mxu0 0.0
        %719 = vmatpush2.xpose.msra.mxu0 0.0
        %720 = vmatprep.subr.mxu0 0.0
        %721 = vmatpush2.xpose.msra.mxu0 0.0
        %722 = vmatprep.subr.mxu0 0.0
        %723 = vmatpush2.xpose.msra.mxu0 0.0
        %724 = vmatprep.subr.mxu0 0.0
        %725 = vmatpush2.xpose.msra.mxu0 0.0
        %726 = vmatprep.subr.mxu0 0.0
        %727 = vmatpush2.xpose.msra.mxu0 0.0
        %728 = vmatprep.subr.mxu0 0.0
        %729 = vmatpush2.xpose.msra.mxu0 0.0
        %730 = vmatprep.subr.mxu0 0.0
        %731 = vmatpush2.xpose.msra.mxu0 0.0
        %732 = vmatprep.subr.mxu0 0.0
        %733 = vmatpush2.xpose.msra.mxu0 0.0
        %734 = vmatprep.subr.mxu0 0.0
        %735 = vmatpush2.xpose.msra.mxu0 0.0
        %736 = vmatprep.mubr.f32.mxu0 0.0
        %737 = vmatmul.mubr.f32.gmra.mxu0 %v668
        %v738 = vpop.f32.mrf.mxu0
        %v739 = vadd.f32 0.0, %v738
        %v740 = vpop.f32.mrf.mxu0
        %741 = vdwg.mxu0
        %743 = vrot.lane.b32.xlu0 %v507, 96
        %v744 = vpop.permute.xlu0 %743
        %v745 = vsel %vm513, %v507, 0
        %v747 = vsel %vm513, %v744, 0
        %749 = vmatprep.subr.mxu0 0.0
        %750 = vmatpush1.xpose.msra.mxu0 0.0
        %751 = vmatprep.subr.mxu0 0.0
        %752 = vmatpush1.xpose.msra.mxu0 0.0
        %753 = vmatprep.subr.mxu0 0.0
        %754 = vmatpush1.xpose.msra.mxu0 0.0
        %755 = vmatprep.subr.mxu0 0.0
        %756 = vmatpush1.xpose.msra.mxu0 0.0
        %757 = vmatprep.subr.mxu0 0.0
        %758 = vmatpush1.xpose.msra.mxu0 0.0
        %759 = vmatprep.subr.mxu0 0.0
        %760 = vmatpush1.xpose.msra.mxu0 0.0
        %761 = vmatprep.subr.mxu0 0.0
        %762 = vmatpush1.xpose.msra.mxu0 0.0
        %763 = vmatprep.subr.mxu0 0.0
        %764 = vmatpush1.xpose.msra.mxu0 0.0
        %765 = vmatprep.subr.mxu0 0.0
        %766 = vmatpush1.xpose.msra.mxu0 0.0
        %767 = vmatprep.subr.mxu0 0.0
        %768 = vmatpush1.xpose.msra.mxu0 0.0
        %769 = vmatprep.subr.mxu0 0.0
        %770 = vmatpush1.xpose.msra.mxu0 0.0
        %771 = vmatprep.subr.mxu0 0.0
        %772 = vmatpush1.xpose.msra.mxu0 0.0
        %773 = vmatprep.subr.mxu0 0.0
        %774 = vmatpush1.xpose.msra.mxu0 0.0
        %775 = vmatprep.subr.mxu0 0.0
        %776 = vmatpush1.xpose.msra.mxu0 0.0
        %777 = vmatprep.subr.mxu0 0.0
        %778 = vmatpush1.xpose.msra.mxu0 0.0
        %779 = vmatprep.subr.mxu0 0.0
        %780 = vmatpush1.xpose.msra.mxu0 %v747
        %781 = vmatprep.subr.mxu0 0.0
        %782 = vmatpush2.xpose.msra.mxu0 0.0
        %783 = vmatprep.subr.mxu0 0.0
        %784 = vmatpush2.xpose.msra.mxu0 0.0
        %785 = vmatprep.subr.mxu0 0.0
        %786 = vmatpush2.xpose.msra.mxu0 0.0
        %787 = vmatprep.subr.mxu0 0.0
        %788 = vmatpush2.xpose.msra.mxu0 0.0
        %789 = vmatprep.subr.mxu0 0.0
        %790 = vmatpush2.xpose.msra.mxu0 0.0
        %791 = vmatprep.subr.mxu0 0.0
        %792 = vmatpush2.xpose.msra.mxu0 0.0
        %793 = vmatprep.subr.mxu0 0.0
        %794 = vmatpush2.xpose.msra.mxu0 0.0
        %795 = vmatprep.subr.mxu0 0.0
        %796 = vmatpush2.xpose.msra.mxu0 0.0
        %797 = vmatprep.subr.mxu0 0.0
        %798 = vmatpush2.xpose.msra.mxu0 0.0
        %799 = vmatprep.subr.mxu0 0.0
        %800 = vmatpush2.xpose.msra.mxu0 0.0
        %801 = vmatprep.subr.mxu0 0.0
        %802 = vmatpush2.xpose.msra.mxu0 0.0
        %803 = vmatprep.subr.mxu0 0.0
        %804 = vmatpush2.xpose.msra.mxu0 0.0
        %805 = vmatprep.subr.mxu0 0.0
        %806 = vmatpush2.xpose.msra.mxu0 0.0
        %807 = vmatprep.subr.mxu0 0.0
        %808 = vmatpush2.xpose.msra.mxu0 0.0
        %809 = vmatprep.subr.mxu0 0.0
        %810 = vmatpush2.xpose.msra.mxu0 0.0
        %811 = vmatprep.subr.mxu0 0.0
        %812 = vmatpush2.xpose.msra.mxu0 0.0
        %813 = vmatprep.mubr.f32.mxu0 0.0
        %814 = vmatmul.mubr.f32.gmra.mxu0 %v745
        %v815 = vpop.f32.mrf.mxu0
        %v816 = vadd.f32 0.0, %v815
        %v817 = vpop.f32.mrf.mxu0
        %818 = vdwg.mxu0
        %v819 = vmul.f32 %v585, 0.25
        %v820 = vmul.f32 %v662, 0.25
        %v821 = vmul.f32 %v739, 0.25
        %v822 = vmul.f32 %v816, 0.25
        %vm823 = vcmask 64512
        %v824 = vsel %vm823, %v819, -inf
        %825 = vmax.xlane.f32.xlu0 %v824
        %v826 = vpop.xlane.xlu0 %825
        %v827 = vsel %vm823, %v820, -inf
        %828 = vmax.xlane.f32.xlu0 %v827
        %v829 = vpop.xlane.xlu0 %828
        %v830 = vsel %vm823, %v821, -inf
        %831 = vmax.xlane.f32.xlu0 %v830
        %v832 = vpop.xlane.xlu0 %831
        %v833 = vsel %vm823, %v822, -inf
        %834 = vmax.xlane.f32.xlu0 %v833
        %v835 = vpop.xlane.xlu0 %834
        %v836 = vsub.f32 %v819, %v826
        %v837 = vsub.f32 %v820, %v829
        %v838 = vsub.f32 %v821, %v832
        %v839 = vsub.f32 %v822, %v835
        %v840 = vmul.f32 %v836, 1.442695
        %v841 = vpow.pop %v840
        %v842 = vmul.f32 %v837, 1.442695
        %v843 = vpow.pop %v842
        %v844 = vmul.f32 %v838, 1.442695
        %v845 = vpow.pop %v844
        %v846 = vmul.f32 %v839, 1.442695
        %v847 = vpow.pop %v846
        %v848 = vsel %vm823, %v841, 0.0
        %849 = vadd.xlane.f32.xlu0 %v848
        %v850 = vpop.xlane.xlu0 %849
        %v851 = vsel %vm823, %v843, 0.0
        %852 = vadd.xlane.f32.xlu0 %v851
        %v853 = vpop.xlane.xlu0 %852
        %v854 = vsel %vm823, %v845, 0.0
        %855 = vadd.xlane.f32.xlu0 %v854
        %v856 = vpop.xlane.xlu0 %855
        %v857 = vsel %vm823, %v847, 0.0
        %858 = vadd.xlane.f32.xlu0 %v857
        %v859 = vpop.xlane.xlu0 %858
        %v860 = vrcp.pop %v850
        %v861 = vrcp.pop %v853
        %v862 = vrcp.pop %v856
        %v863 = vrcp.pop %v859
        %v864 = vmul.f32 %v841, %v860
        %v865 = vmul.f32 %v843, %v861
        %v866 = vmul.f32 %v845, %v862
        %v867 = vmul.f32 %v847, %v863
        %868 = vrot.lane.b32.xlu0 %v492, 64
        %v869 = vpop.permute.xlu0 %868
        %v872 = vsel %vm823, %v864, 0
        %874 = vmatprep.subr.mxu0 0.0
        %875 = vmatpush1.msra.mxu0 0.0
        %876 = vmatprep.subr.mxu0 0.0
        %877 = vmatpush1.msra.mxu0 0.0
        %878 = vmatprep.subr.mxu0 0.0
        %879 = vmatpush1.msra.mxu0 0.0
        %880 = vmatprep.subr.mxu0 0.0
        %881 = vmatpush1.msra.mxu0 0.0
        %882 = vmatprep.subr.mxu0 0.0
        %883 = vmatpush1.msra.mxu0 0.0
        %884 = vmatprep.subr.mxu0 0.0
        %885 = vmatpush1.msra.mxu0 0.0
        %886 = vmatprep.subr.mxu0 0.0
        %887 = vmatpush1.msra.mxu0 0.0
        %888 = vmatprep.subr.mxu0 0.0
        %889 = vmatpush1.msra.mxu0 0.0
        %890 = vmatprep.subr.mxu0 0.0
        %891 = vmatpush1.msra.mxu0 0.0
        %892 = vmatprep.subr.mxu0 0.0
        %893 = vmatpush1.msra.mxu0 0.0
        %894 = vmatprep.subr.mxu0 0.0
        %895 = vmatpush1.msra.mxu0 0.0
        %896 = vmatprep.subr.mxu0 0.0
        %897 = vmatpush1.msra.mxu0 0.0
        %898 = vmatprep.subr.mxu0 0.0
        %899 = vmatpush1.msra.mxu0 0.0
        %900 = vmatprep.subr.mxu0 0.0
        %901 = vmatpush1.msra.mxu0 0.0
        %902 = vmatprep.subr.mxu0 0.0
        %903 = vmatpush1.msra.mxu0 0.0
        %904 = vmatprep.subr.mxu0 0.0
        %905 = vmatpush1.msra.mxu0 %v869
        %906 = vmatprep.subr.mxu0 0.0
        %907 = vmatpush2.msra.mxu0 0.0
        %908 = vmatprep.subr.mxu0 0.0
        %909 = vmatpush2.msra.mxu0 0.0
        %910 = vmatprep.subr.mxu0 0.0
        %911 = vmatpush2.msra.mxu0 0.0
        %912 = vmatprep.subr.mxu0 0.0
        %913 = vmatpush2.msra.mxu0 0.0
        %914 = vmatprep.subr.mxu0 0.0
        %915 = vmatpush2.msra.mxu0 0.0
        %916 = vmatprep.subr.mxu0 0.0
        %917 = vmatpush2.msra.mxu0 0.0
        %918 = vmatprep.subr.mxu0 0.0
        %919 = vmatpush2.msra.mxu0 0.0
        %920 = vmatprep.subr.mxu0 0.0
        %921 = vmatpush2.msra.mxu0 0.0
        %922 = vmatprep.subr.mxu0 0.0
        %923 = vmatpush2.msra.mxu0 0.0
        %924 = vmatprep.subr.mxu0 0.0
        %925 = vmatpush2.msra.mxu0 0.0
        %926 = vmatprep.subr.mxu0 0.0
        %927 = vmatpush2.msra.mxu0 0.0
        %928 = vmatprep.subr.mxu0 0.0
        %929 = vmatpush2.msra.mxu0 0.0
        %930 = vmatprep.subr.mxu0 0.0
        %931 = vmatpush2.msra.mxu0 0.0
        %932 = vmatprep.subr.mxu0 0.0
        %933 = vmatpush2.msra.mxu0 0.0
        %934 = vmatprep.subr.mxu0 0.0
        %935 = vmatpush2.msra.mxu0 0.0
        %936 = vmatprep.subr.mxu0 0.0
        %937 = vmatpush2.msra.mxu0 0.0
        %938 = vmatprep.mubr.f32.mxu0 0.0
        %939 = vmatmul.mubr.f32.gmra.mxu0 %v872
        %v940 = vpop.f32.mrf.mxu0
        %v941 = vadd.f32 0.0, %v940
        %v942 = vpop.f32.mrf.mxu0
        %943 = vdwg.mxu0
        %944 = vrot.lane.b32.xlu0 %v497, 64
        %v945 = vpop.permute.xlu0 %944
        %v948 = vsel %vm823, %v865, 0
        %950 = vmatprep.subr.mxu0 0.0
        %951 = vmatpush1.msra.mxu0 0.0
        %952 = vmatprep.subr.mxu0 0.0
        %953 = vmatpush1.msra.mxu0 0.0
        %954 = vmatprep.subr.mxu0 0.0
        %955 = vmatpush1.msra.mxu0 0.0
        %956 = vmatprep.subr.mxu0 0.0
        %957 = vmatpush1.msra.mxu0 0.0
        %958 = vmatprep.subr.mxu0 0.0
        %959 = vmatpush1.msra.mxu0 0.0
        %960 = vmatprep.subr.mxu0 0.0
        %961 = vmatpush1.msra.mxu0 0.0
        %962 = vmatprep.subr.mxu0 0.0
        %963 = vmatpush1.msra.mxu0 0.0
        %964 = vmatprep.subr.mxu0 0.0
        %965 = vmatpush1.msra.mxu0 0.0
        %966 = vmatprep.subr.mxu0 0.0
        %967 = vmatpush1.msra.mxu0 0.0
        %968 = vmatprep.subr.mxu0 0.0
        %969 = vmatpush1.msra.mxu0 0.0
        %970 = vmatprep.subr.mxu0 0.0
        %971 = vmatpush1.msra.mxu0 0.0
        %972 = vmatprep.subr.mxu0 0.0
        %973 = vmatpush1.msra.mxu0 0.0
        %974 = vmatprep.subr.mxu0 0.0
        %975 = vmatpush1.msra.mxu0 0.0
        %976 = vmatprep.subr.mxu0 0.0
        %977 = vmatpush1.msra.mxu0 0.0
        %978 = vmatprep.subr.mxu0 0.0
        %979 = vmatpush1.msra.mxu0 0.0
        %980 = vmatprep.subr.mxu0 0.0
        %981 = vmatpush1.msra.mxu0 %v945
        %982 = vmatprep.subr.mxu0 0.0
        %983 = vmatpush2.msra.mxu0 0.0
        %984 = vmatprep.subr.mxu0 0.0
        %985 = vmatpush2.msra.mxu0 0.0
        %986 = vmatprep.subr.mxu0 0.0
        %987 = vmatpush2.msra.mxu0 0.0
        %988 = vmatprep.subr.mxu0 0.0
        %989 = vmatpush2.msra.mxu0 0.0
        %990 = vmatprep.subr.mxu0 0.0
        %991 = vmatpush2.msra.mxu0 0.0
        %992 = vmatprep.subr.mxu0 0.0
        %993 = vmatpush2.msra.mxu0 0.0
        %994 = vmatprep.subr.mxu0 0.0
        %995 = vmatpush2.msra.mxu0 0.0
        %996 = vmatprep.subr.mxu0 0.0
        %997 = vmatpush2.msra.mxu0 0.0
        %998 = vmatprep.subr.mxu0 0.0
        %999 = vmatpush2.msra.mxu0 0.0
        %1000 = vmatprep.subr.mxu0 0.0
        %1001 = vmatpush2.msra.mxu0 0.0
        %1002 = vmatprep.subr.mxu0 0.0
        %1003 = vmatpush2.msra.mxu0 0.0
        %1004 = vmatprep.subr.mxu0 0.0
        %1005 = vmatpush2.msra.mxu0 0.0
        %1006 = vmatprep.subr.mxu0 0.0
        %1007 = vmatpush2.msra.mxu0 0.0
        %1008 = vmatprep.subr.mxu0 0.0
        %1009 = vmatpush2.msra.mxu0 0.0
        %1010 = vmatprep.subr.mxu0 0.0
        %1011 = vmatpush2.msra.mxu0 0.0
        %1012 = vmatprep.subr.mxu0 0.0
        %1013 = vmatpush2.msra.mxu0 0.0
        %1014 = vmatprep.mubr.f32.mxu0 0.0
        %1015 = vmatmul.mubr.f32.gmra.mxu0 %v948
        %v1016 = vpop.f32.mrf.mxu0
        %v1017 = vadd.f32 0.0, %v1016
        %v1018 = vpop.f32.mrf.mxu0
        %1019 = vdwg.mxu0
        %1020 = vrot.lane.b32.xlu0 %v502, 64
        %v1021 = vpop.permute.xlu0 %1020
        %v1024 = vsel %vm823, %v866, 0
        %1026 = vmatprep.subr.mxu0 0.0
        %1027 = vmatpush1.msra.mxu0 0.0
        %1028 = vmatprep.subr.mxu0 0.0
        %1029 = vmatpush1.msra.mxu0 0.0
        %1030 = vmatprep.subr.mxu0 0.0
        %1031 = vmatpush1.msra.mxu0 0.0
        %1032 = vmatprep.subr.mxu0 0.0
        %1033 = vmatpush1.msra.mxu0 0.0
        %1034 = vmatprep.subr.mxu0 0.0
        %1035 = vmatpush1.msra.mxu0 0.0
        %1036 = vmatprep.subr.mxu0 0.0
        %1037 = vmatpush1.msra.mxu0 0.0
        %1038 = vmatprep.subr.mxu0 0.0
        %1039 = vmatpush1.msra.mxu0 0.0
        %1040 = vmatprep.subr.mxu0 0.0
        %1041 = vmatpush1.msra.mxu0 0.0
        %1042 = vmatprep.subr.mxu0 0.0
        %1043 = vmatpush1.msra.mxu0 0.0
        %1044 = vmatprep.subr.mxu0 0.0
        %1045 = vmatpush1.msra.mxu0 0.0
        %1046 = vmatprep.subr.mxu0 0.0
        %1047 = vmatpush1.msra.mxu0 0.0
        %1048 = vmatprep.subr.mxu0 0.0
        %1049 = vmatpush1.msra.mxu0 0.0
        %1050 = vmatprep.subr.mxu0 0.0
        %1051 = vmatpush1.msra.mxu0 0.0
        %1052 = vmatprep.subr.mxu0 0.0
        %1053 = vmatpush1.msra.mxu0 0.0
        %1054 = vmatprep.subr.mxu0 0.0
        %1055 = vmatpush1.msra.mxu0 0.0
        %1056 = vmatprep.subr.mxu0 0.0
        %1057 = vmatpush1.msra.mxu0 %v1021
        %1058 = vmatprep.subr.mxu0 0.0
        %1059 = vmatpush2.msra.mxu0 0.0
        %1060 = vmatprep.subr.mxu0 0.0
        %1061 = vmatpush2.msra.mxu0 0.0
        %1062 = vmatprep.subr.mxu0 0.0
        %1063 = vmatpush2.msra.mxu0 0.0
        %1064 = vmatprep.subr.mxu0 0.0
        %1065 = vmatpush2.msra.mxu0 0.0
        %1066 = vmatprep.subr.mxu0 0.0
        %1067 = vmatpush2.msra.mxu0 0.0
        %1068 = vmatprep.subr.mxu0 0.0
        %1069 = vmatpush2.msra.mxu0 0.0
        %1070 = vmatprep.subr.mxu0 0.0
        %1071 = vmatpush2.msra.mxu0 0.0
        %1072 = vmatprep.subr.mxu0 0.0
        %1073 = vmatpush2.msra.mxu0 0.0
        %1074 = vmatprep.subr.mxu0 0.0
        %1075 = vmatpush2.msra.mxu0 0.0
        %1076 = vmatprep.subr.mxu0 0.0
        %1077 = vmatpush2.msra.mxu0 0.0
        %1078 = vmatprep.subr.mxu0 0.0
        %1079 = vmatpush2.msra.mxu0 0.0
        %1080 = vmatprep.subr.mxu0 0.0
        %1081 = vmatpush2.msra.mxu0 0.0
        %1082 = vmatprep.subr.mxu0 0.0
        %1083 = vmatpush2.msra.mxu0 0.0
        %1084 = vmatprep.subr.mxu0 0.0
        %1085 = vmatpush2.msra.mxu0 0.0
        %1086 = vmatprep.subr.mxu0 0.0
        %1087 = vmatpush2.msra.mxu0 0.0
        %1088 = vmatprep.subr.mxu0 0.0
        %1089 = vmatpush2.msra.mxu0 0.0
        %1090 = vmatprep.mubr.f32.mxu0 0.0
        %1091 = vmatmul.mubr.f32.gmra.mxu0 %v1024
        %v1092 = vpop.f32.mrf.mxu0
        %v1093 = vadd.f32 0.0, %v1092
        %v1094 = vpop.f32.mrf.mxu0
        %1095 = vdwg.mxu0
        %1096 = vrot.lane.b32.xlu0 %v507, 64
        %v1097 = vpop.permute.xlu0 %1096
        %v1100 = vsel %vm823, %v867, 0
        %1102 = vmatprep.subr.mxu0 0.0
        %1103 = vmatpush1.msra.mxu0 0.0
        %1104 = vmatprep.subr.mxu0 0.0
        %1105 = vmatpush1.msra.mxu0 0.0
        %1106 = vmatprep.subr.mxu0 0.0
        %1107 = vmatpush1.msra.mxu0 0.0
        %1108 = vmatprep.subr.mxu0 0.0
        %1109 = vmatpush1.msra.mxu0 0.0
        %1110 = vmatprep.subr.mxu0 0.0
        %1111 = vmatpush1.msra.mxu0 0.0
        %1112 = vmatprep.subr.mxu0 0.0
        %1113 = vmatpush1.msra.mxu0 0.0
        %1114 = vmatprep.subr.mxu0 0.0
        %1115 = vmatpush1.msra.mxu0 0.0
        %1116 = vmatprep.subr.mxu0 0.0
        %1117 = vmatpush1.msra.mxu0 0.0
        %1118 = vmatprep.subr.mxu0 0.0
        %1119 = vmatpush1.msra.mxu0 0.0
        %1120 = vmatprep.subr.mxu0 0.0
        %1121 = vmatpush1.msra.mxu0 0.0
        %1122 = vmatprep.subr.mxu0 0.0
        %1123 = vmatpush1.msra.mxu0 0.0
        %1124 = vmatprep.subr.mxu0 0.0
        %1125 = vmatpush1.msra.mxu0 0.0
        %1126 = vmatprep.subr.mxu0 0.0
        %1127 = vmatpush1.msra.mxu0 0.0
        %1128 = vmatprep.subr.mxu0 0.0
        %1129 = vmatpush1.msra.mxu0 0.0
        %1130 = vmatprep.subr.mxu0 0.0
        %1131 = vmatpush1.msra.mxu0 0.0
        %1132 = vmatprep.subr.mxu0 0.0
        %1133 = vmatpush1.msra.mxu0 %v1097
        %1134 = vmatprep.subr.mxu0 0.0
        %1135 = vmatpush2.msra.mxu0 0.0
        %1136 = vmatprep.subr.mxu0 0.0
        %1137 = vmatpush2.msra.mxu0 0.0
        %1138 = vmatprep.subr.mxu0 0.0
        %1139 = vmatpush2.msra.mxu0 0.0
        %1140 = vmatprep.subr.mxu0 0.0
        %1141 = vmatpush2.msra.mxu0 0.0
        %1142 = vmatprep.subr.mxu0 0.0
        %1143 = vmatpush2.msra.mxu0 0.0
        %1144 = vmatprep.subr.mxu0 0.0
        %1145 = vmatpush2.msra.mxu0 0.0
        %1146 = vmatprep.subr.mxu0 0.0
        %1147 = vmatpush2.msra.mxu0 0.0
        %1148 = vmatprep.subr.mxu0 0.0
        %1149 = vmatpush2.msra.mxu0 0.0
        %1150 = vmatprep.subr.mxu0 0.0
        %1151 = vmatpush2.msra.mxu0 0.0
        %1152 = vmatprep.subr.mxu0 0.0
        %1153 = vmatpush2.msra.mxu0 0.0
        %1154 = vmatprep.subr.mxu0 0.0
        %1155 = vmatpush2.msra.mxu0 0.0
        %1156 = vmatprep.subr.mxu0 0.0
        %1157 = vmatpush2.msra.mxu0 0.0
        %1158 = vmatprep.subr.mxu0 0.0
        %1159 = vmatpush2.msra.mxu0 0.0
        %1160 = vmatprep.subr.mxu0 0.0
        %1161 = vmatpush2.msra.mxu0 0.0
        %1162 = vmatprep.subr.mxu0 0.0
        %1163 = vmatpush2.msra.mxu0 0.0
        %1164 = vmatprep.subr.mxu0 0.0
        %1165 = vmatpush2.msra.mxu0 0.0
        %1166 = vmatprep.mubr.f32.mxu0 0.0
        %1167 = vmatmul.mubr.f32.gmra.mxu0 %v1100
        %v1168 = vpop.f32.mrf.mxu0
        %v1169 = vadd.f32 0.0, %v1168
        %v1170 = vpop.f32.mrf.mxu0
        %1171 = vdwg.mxu0
        %1172 = vrot.lane.b32.xlu0 %v492, 112
        %v1173 = vpop.permute.xlu0 %1172
        %1174 = vrot.lane.b32.xlu0 %v492, 80
        %v1175 = vpop.permute.xlu0 %1174
        %v1176 = vsel %vm513, %v1173, 0
        %v1178 = vsel %vm513, %v1175, 0
        %1180 = vmatprep.subr.mxu0 0.0
        %1181 = vmatpush1.xpose.msra.mxu0 0.0
        %1182 = vmatprep.subr.mxu0 0.0
        %1183 = vmatpush1.xpose.msra.mxu0 0.0
        %1184 = vmatprep.subr.mxu0 0.0
        %1185 = vmatpush1.xpose.msra.mxu0 0.0
        %1186 = vmatprep.subr.mxu0 0.0
        %1187 = vmatpush1.xpose.msra.mxu0 0.0
        %1188 = vmatprep.subr.mxu0 0.0
        %1189 = vmatpush1.xpose.msra.mxu0 0.0
        %1190 = vmatprep.subr.mxu0 0.0
        %1191 = vmatpush1.xpose.msra.mxu0 0.0
        %1192 = vmatprep.subr.mxu0 0.0
        %1193 = vmatpush1.xpose.msra.mxu0 0.0
        %1194 = vmatprep.subr.mxu0 0.0
        %1195 = vmatpush1.xpose.msra.mxu0 0.0
        %1196 = vmatprep.subr.mxu0 0.0
        %1197 = vmatpush1.xpose.msra.mxu0 0.0
        %1198 = vmatprep.subr.mxu0 0.0
        %1199 = vmatpush1.xpose.msra.mxu0 0.0
        %1200 = vmatprep.subr.mxu0 0.0
        %1201 = vmatpush1.xpose.msra.mxu0 0.0
        %1202 = vmatprep.subr.mxu0 0.0
        %1203 = vmatpush1.xpose.msra.mxu0 0.0
        %1204 = vmatprep.subr.mxu0 0.0
        %1205 = vmatpush1.xpose.msra.mxu0 0.0
        %1206 = vmatprep.subr.mxu0 0.0
        %1207 = vmatpush1.xpose.msra.mxu0 0.0
        %1208 = vmatprep.subr.mxu0 0.0
        %1209 = vmatpush1.xpose.msra.mxu0 0.0
        %1210 = vmatprep.subr.mxu0 0.0
        %1211 = vmatpush1.xpose.msra.mxu0 %v1178
        %1212 = vmatprep.subr.mxu0 0.0
        %1213 = vmatpush2.xpose.msra.mxu0 0.0
        %1214 = vmatprep.subr.mxu0 0.0
        %1215 = vmatpush2.xpose.msra.mxu0 0.0
        %1216 = vmatprep.subr.mxu0 0.0
        %1217 = vmatpush2.xpose.msra.mxu0 0.0
        %1218 = vmatprep.subr.mxu0 0.0
        %1219 = vmatpush2.xpose.msra.mxu0 0.0
        %1220 = vmatprep.subr.mxu0 0.0
        %1221 = vmatpush2.xpose.msra.mxu0 0.0
        %1222 = vmatprep.subr.mxu0 0.0
        %1223 = vmatpush2.xpose.msra.mxu0 0.0
        %1224 = vmatprep.subr.mxu0 0.0
        %1225 = vmatpush2.xpose.msra.mxu0 0.0
        %1226 = vmatprep.subr.mxu0 0.0
        %1227 = vmatpush2.xpose.msra.mxu0 0.0
        %1228 = vmatprep.subr.mxu0 0.0
        %1229 = vmatpush2.xpose.msra.mxu0 0.0
        %1230 = vmatprep.subr.mxu0 0.0
        %1231 = vmatpush2.xpose.msra.mxu0 0.0
        %1232 = vmatprep.subr.mxu0 0.0
        %1233 = vmatpush2.xpose.msra.mxu0 0.0
        %1234 = vmatprep.subr.mxu0 0.0
        %1235 = vmatpush2.xpose.msra.mxu0 0.0
        %1236 = vmatprep.subr.mxu0 0.0
        %1237 = vmatpush2.xpose.msra.mxu0 0.0
        %1238 = vmatprep.subr.mxu0 0.0
        %1239 = vmatpush2.xpose.msra.mxu0 0.0
        %1240 = vmatprep.subr.mxu0 0.0
        %1241 = vmatpush2.xpose.msra.mxu0 0.0
        %1242 = vmatprep.subr.mxu0 0.0
        %1243 = vmatpush2.xpose.msra.mxu0 0.0
        %1244 = vmatprep.mubr.f32.mxu0 0.0
        %1245 = vmatmul.mubr.f32.gmra.mxu0 %v1176
        %v1246 = vpop.f32.mrf.mxu0
        %v1247 = vadd.f32 0.0, %v1246
        %v1248 = vpop.f32.mrf.mxu0
        %1249 = vdwg.mxu0
        %1250 = vrot.lane.b32.xlu0 %v497, 112
        %v1251 = vpop.permute.xlu0 %1250
        %1252 = vrot.lane.b32.xlu0 %v497, 80
        %v1253 = vpop.permute.xlu0 %1252
        %v1254 = vsel %vm513, %v1251, 0
        %v1256 = vsel %vm513, %v1253, 0
        %1258 = vmatprep.subr.mxu0 0.0
        %1259 = vmatpush1.xpose.msra.mxu0 0.0
        %1260 = vmatprep.subr.mxu0 0.0
        %1261 = vmatpush1.xpose.msra.mxu0 0.0
        %1262 = vmatprep.subr.mxu0 0.0
        %1263 = vmatpush1.xpose.msra.mxu0 0.0
        %1264 = vmatprep.subr.mxu0 0.0
        %1265 = vmatpush1.xpose.msra.mxu0 0.0
        %1266 = vmatprep.subr.mxu0 0.0
        %1267 = vmatpush1.xpose.msra.mxu0 0.0
        %1268 = vmatprep.subr.mxu0 0.0
        %1269 = vmatpush1.xpose.msra.mxu0 0.0
        %1270 = vmatprep.subr.mxu0 0.0
        %1271 = vmatpush1.xpose.msra.mxu0 0.0
        %1272 = vmatprep.subr.mxu0 0.0
        %1273 = vmatpush1.xpose.msra.mxu0 0.0
        %1274 = vmatprep.subr.mxu0 0.0
        %1275 = vmatpush1.xpose.msra.mxu0 0.0
        %1276 = vmatprep.subr.mxu0 0.0
        %1277 = vmatpush1.xpose.msra.mxu0 0.0
        %1278 = vmatprep.subr.mxu0 0.0
        %1279 = vmatpush1.xpose.msra.mxu0 0.0
        %1280 = vmatprep.subr.mxu0 0.0
        %1281 = vmatpush1.xpose.msra.mxu0 0.0
        %1282 = vmatprep.subr.mxu0 0.0
        %1283 = vmatpush1.xpose.msra.mxu0 0.0
        %1284 = vmatprep.subr.mxu0 0.0
        %1285 = vmatpush1.xpose.msra.mxu0 0.0
        %1286 = vmatprep.subr.mxu0 0.0
        %1287 = vmatpush1.xpose.msra.mxu0 0.0
        %1288 = vmatprep.subr.mxu0 0.0
        %1289 = vmatpush1.xpose.msra.mxu0 %v1256
        %1290 = vmatprep.subr.mxu0 0.0
        %1291 = vmatpush2.xpose.msra.mxu0 0.0
        %1292 = vmatprep.subr.mxu0 0.0
        %1293 = vmatpush2.xpose.msra.mxu0 0.0
        %1294 = vmatprep.subr.mxu0 0.0
        %1295 = vmatpush2.xpose.msra.mxu0 0.0
        %1296 = vmatprep.subr.mxu0 0.0
        %1297 = vmatpush2.xpose.msra.mxu0 0.0
        %1298 = vmatprep.subr.mxu0 0.0
        %1299 = vmatpush2.xpose.msra.mxu0 0.0
        %1300 = vmatprep.subr.mxu0 0.0
        %1301 = vmatpush2.xpose.msra.mxu0 0.0
        %1302 = vmatprep.subr.mxu0 0.0
        %1303 = vmatpush2.xpose.msra.mxu0 0.0
        %1304 = vmatprep.subr.mxu0 0.0
        %1305 = vmatpush2.xpose.msra.mxu0 0.0
        %1306 = vmatprep.subr.mxu0 0.0
        %1307 = vmatpush2.xpose.msra.mxu0 0.0
        %1308 = vmatprep.subr.mxu0 0.0
        %1309 = vmatpush2.xpose.msra.mxu0 0.0
        %1310 = vmatprep.subr.mxu0 0.0
        %1311 = vmatpush2.xpose.msra.mxu0 0.0
        %1312 = vmatprep.subr.mxu0 0.0
        %1313 = vmatpush2.xpose.msra.mxu0 0.0
        %1314 = vmatprep.subr.mxu0 0.0
        %1315 = vmatpush2.xpose.msra.mxu0 0.0
        %1316 = vmatprep.subr.mxu0 0.0
        %1317 = vmatpush2.xpose.msra.mxu0 0.0
        %1318 = vmatprep.subr.mxu0 0.0
        %1319 = vmatpush2.xpose.msra.mxu0 0.0
        %1320 = vmatprep.subr.mxu0 0.0
        %1321 = vmatpush2.xpose.msra.mxu0 0.0
        %1322 = vmatprep.mubr.f32.mxu0 0.0
        %1323 = vmatmul.mubr.f32.gmra.mxu0 %v1254
        %v1324 = vpop.f32.mrf.mxu0
        %v1325 = vadd.f32 0.0, %v1324
        %v1326 = vpop.f32.mrf.mxu0
        %1327 = vdwg.mxu0
        %1328 = vrot.lane.b32.xlu0 %v502, 112
        %v1329 = vpop.permute.xlu0 %1328
        %1330 = vrot.lane.b32.xlu0 %v502, 80
        %v1331 = vpop.permute.xlu0 %1330
        %v1332 = vsel %vm513, %v1329, 0
        %v1334 = vsel %vm513, %v1331, 0
        %1336 = vmatprep.subr.mxu0 0.0
        %1337 = vmatpush1.xpose.msra.mxu0 0.0
        %1338 = vmatprep.subr.mxu0 0.0
        %1339 = vmatpush1.xpose.msra.mxu0 0.0
        %1340 = vmatprep.subr.mxu0 0.0
        %1341 = vmatpush1.xpose.msra.mxu0 0.0
        %1342 = vmatprep.subr.mxu0 0.0
        %1343 = vmatpush1.xpose.msra.mxu0 0.0
        %1344 = vmatprep.subr.mxu0 0.0
        %1345 = vmatpush1.xpose.msra.mxu0 0.0
        %1346 = vmatprep.subr.mxu0 0.0
        %1347 = vmatpush1.xpose.msra.mxu0 0.0
        %1348 = vmatprep.subr.mxu0 0.0
        %1349 = vmatpush1.xpose.msra.mxu0 0.0
        %1350 = vmatprep.subr.mxu0 0.0
        %1351 = vmatpush1.xpose.msra.mxu0 0.0
        %1352 = vmatprep.subr.mxu0 0.0
        %1353 = vmatpush1.xpose.msra.mxu0 0.0
        %1354 = vmatprep.subr.mxu0 0.0
        %1355 = vmatpush1.xpose.msra.mxu0 0.0
        %1356 = vmatprep.subr.mxu0 0.0
        %1357 = vmatpush1.xpose.msra.mxu0 0.0
        %1358 = vmatprep.subr.mxu0 0.0
        %1359 = vmatpush1.xpose.msra.mxu0 0.0
        %1360 = vmatprep.subr.mxu0 0.0
        %1361 = vmatpush1.xpose.msra.mxu0 0.0
        %1362 = vmatprep.subr.mxu0 0.0
        %1363 = vmatpush1.xpose.msra.mxu0 0.0
        %1364 = vmatprep.subr.mxu0 0.0
        %1365 = vmatpush1.xpose.msra.mxu0 0.0
        %1366 = vmatprep.subr.mxu0 0.0
        %1367 = vmatpush1.xpose.msra.mxu0 %v1334
        %1368 = vmatprep.subr.mxu0 0.0
        %1369 = vmatpush2.xpose.msra.mxu0 0.0
        %1370 = vmatprep.subr.mxu0 0.0
        %1371 = vmatpush2.xpose.msra.mxu0 0.0
        %1372 = vmatprep.subr.mxu0 0.0
        %1373 = vmatpush2.xpose.msra.mxu0 0.0
        %1374 = vmatprep.subr.mxu0 0.0
        %1375 = vmatpush2.xpose.msra.mxu0 0.0
        %1376 = vmatprep.subr.mxu0 0.0
        %1377 = vmatpush2.xpose.msra.mxu0 0.0
        %1378 = vmatprep.subr.mxu0 0.0
        %1379 = vmatpush2.xpose.msra.mxu0 0.0
        %1380 = vmatprep.subr.mxu0 0.0
        %1381 = vmatpush2.xpose.msra.mxu0 0.0
        %1382 = vmatprep.subr.mxu0 0.0
        %1383 = vmatpush2.xpose.msra.mxu0 0.0
        %1384 = vmatprep.subr.mxu0 0.0
        %1385 = vmatpush2.xpose.msra.mxu0 0.0
        %1386 = vmatprep.subr.mxu0 0.0
        %1387 = vmatpush2.xpose.msra.mxu0 0.0
        %1388 = vmatprep.subr.mxu0 0.0
        %1389 = vmatpush2.xpose.msra.mxu0 0.0
        %1390 = vmatprep.subr.mxu0 0.0
        %1391 = vmatpush2.xpose.msra.mxu0 0.0
        %1392 = vmatprep.subr.mxu0 0.0
        %1393 = vmatpush2.xpose.msra.mxu0 0.0
        %1394 = vmatprep.subr.mxu0 0.0
        %1395 = vmatpush2.xpose.msra.mxu0 0.0
        %1396 = vmatprep.subr.mxu0 0.0
        %1397 = vmatpush2.xpose.msra.mxu0 0.0
        %1398 = vmatprep.subr.mxu0 0.0
        %1399 = vmatpush2.xpose.msra.mxu0 0.0
        %1400 = vmatprep.mubr.f32.mxu0 0.0
        %1401 = vmatmul.mubr.f32.gmra.mxu0 %v1332
        %v1402 = vpop.f32.mrf.mxu0
        %v1403 = vadd.f32 0.0, %v1402
        %v1404 = vpop.f32.mrf.mxu0
        %1405 = vdwg.mxu0
        %1406 = vrot.lane.b32.xlu0 %v507, 112
        %v1407 = vpop.permute.xlu0 %1406
        %1408 = vrot.lane.b32.xlu0 %v507, 80
        %v1409 = vpop.permute.xlu0 %1408
        %v1410 = vsel %vm513, %v1407, 0
        %v1412 = vsel %vm513, %v1409, 0
        %1414 = vmatprep.subr.mxu0 0.0
        %1415 = vmatpush1.xpose.msra.mxu0 0.0
        %1416 = vmatprep.subr.mxu0 0.0
        %1417 = vmatpush1.xpose.msra.mxu0 0.0
        %1418 = vmatprep.subr.mxu0 0.0
        %1419 = vmatpush1.xpose.msra.mxu0 0.0
        %1420 = vmatprep.subr.mxu0 0.0
        %1421 = vmatpush1.xpose.msra.mxu0 0.0
        %1422 = vmatprep.subr.mxu0 0.0
        %1423 = vmatpush1.xpose.msra.mxu0 0.0
        %1424 = vmatprep.subr.mxu0 0.0
        %1425 = vmatpush1.xpose.msra.mxu0 0.0
        %1426 = vmatprep.subr.mxu0 0.0
        %1427 = vmatpush1.xpose.msra.mxu0 0.0
        %1428 = vmatprep.subr.mxu0 0.0
        %1429 = vmatpush1.xpose.msra.mxu0 0.0
        %1430 = vmatprep.subr.mxu0 0.0
        %1431 = vmatpush1.xpose.msra.mxu0 0.0
        %1432 = vmatprep.subr.mxu0 0.0
        %1433 = vmatpush1.xpose.msra.mxu0 0.0
        %1434 = vmatprep.subr.mxu0 0.0
        %1435 = vmatpush1.xpose.msra.mxu0 0.0
        %1436 = vmatprep.subr.mxu0 0.0
        %1437 = vmatpush1.xpose.msra.mxu0 0.0
        %1438 = vmatprep.subr.mxu0 0.0
        %1439 = vmatpush1.xpose.msra.mxu0 0.0
        %1440 = vmatprep.subr.mxu0 0.0
        %1441 = vmatpush1.xpose.msra.mxu0 0.0
        %1442 = vmatprep.subr.mxu0 0.0
        %1443 = vmatpush1.xpose.msra.mxu0 0.0
        %1444 = vmatprep.subr.mxu0 0.0
        %1445 = vmatpush1.xpose.msra.mxu0 %v1412
        %1446 = vmatprep.subr.mxu0 0.0
        %1447 = vmatpush2.xpose.msra.mxu0 0.0
        %1448 = vmatprep.subr.mxu0 0.0
        %1449 = vmatpush2.xpose.msra.mxu0 0.0
        %1450 = vmatprep.subr.mxu0 0.0
        %1451 = vmatpush2.xpose.msra.mxu0 0.0
        %1452 = vmatprep.subr.mxu0 0.0
        %1453 = vmatpush2.xpose.msra.mxu0 0.0
        %1454 = vmatprep.subr.mxu0 0.0
        %1455 = vmatpush2.xpose.msra.mxu0 0.0
        %1456 = vmatprep.subr.mxu0 0.0
        %1457 = vmatpush2.xpose.msra.mxu0 0.0
        %1458 = vmatprep.subr.mxu0 0.0
        %1459 = vmatpush2.xpose.msra.mxu0 0.0
        %1460 = vmatprep.subr.mxu0 0.0
        %1461 = vmatpush2.xpose.msra.mxu0 0.0
        %1462 = vmatprep.subr.mxu0 0.0
        %1463 = vmatpush2.xpose.msra.mxu0 0.0
        %1464 = vmatprep.subr.mxu0 0.0
        %1465 = vmatpush2.xpose.msra.mxu0 0.0
        %1466 = vmatprep.subr.mxu0 0.0
        %1467 = vmatpush2.xpose.msra.mxu0 0.0
        %1468 = vmatprep.subr.mxu0 0.0
        %1469 = vmatpush2.xpose.msra.mxu0 0.0
        %1470 = vmatprep.subr.mxu0 0.0
        %1471 = vmatpush2.xpose.msra.mxu0 0.0
        %1472 = vmatprep.subr.mxu0 0.0
        %1473 = vmatpush2.xpose.msra.mxu0 0.0
        %1474 = vmatprep.subr.mxu0 0.0
        %1475 = vmatpush2.xpose.msra.mxu0 0.0
        %1476 = vmatprep.subr.mxu0 0.0
        %1477 = vmatpush2.xpose.msra.mxu0 0.0
        %1478 = vmatprep.mubr.f32.mxu0 0.0
        %1479 = vmatmul.mubr.f32.gmra.mxu0 %v1410
        %v1480 = vpop.f32.mrf.mxu0
        %v1481 = vadd.f32 0.0, %v1480
        %v1482 = vpop.f32.mrf.mxu0
        %1483 = vdwg.mxu0
        %v1484 = vmul.f32 %v1247, 0.25
        %v1485 = vmul.f32 %v1325, 0.25
        %v1486 = vmul.f32 %v1403, 0.25
        %v1487 = vmul.f32 %v1481, 0.25
        %v1488 = vsel %vm823, %v1484, -inf
        %1489 = vmax.xlane.f32.xlu0 %v1488
        %v1490 = vpop.xlane.xlu0 %1489
        %v1491 = vsel %vm823, %v1485, -inf
        %1492 = vmax.xlane.f32.xlu0 %v1491
        %v1493 = vpop.xlane.xlu0 %1492
        %v1494 = vsel %vm823, %v1486, -inf
        %1495 = vmax.xlane.f32.xlu0 %v1494
        %v1496 = vpop.xlane.xlu0 %1495
        %v1497 = vsel %vm823, %v1487, -inf
        %1498 = vmax.xlane.f32.xlu0 %v1497
        %v1499 = vpop.xlane.xlu0 %1498
        %v1500 = vsub.f32 %v1484, %v1490
        %v1501 = vsub.f32 %v1485, %v1493
        %v1502 = vsub.f32 %v1486, %v1496
        %v1503 = vsub.f32 %v1487, %v1499
        %v1504 = vmul.f32 %v1500, 1.442695
        %v1505 = vpow.pop %v1504
        %v1506 = vmul.f32 %v1501, 1.442695
        %v1507 = vpow.pop %v1506
        %v1508 = vmul.f32 %v1502, 1.442695
        %v1509 = vpow.pop %v1508
        %v1510 = vmul.f32 %v1503, 1.442695
        %v1511 = vpow.pop %v1510
        %v1512 = vsel %vm823, %v1505, 0.0
        %1513 = vadd.xlane.f32.xlu0 %v1512
        %v1514 = vpop.xlane.xlu0 %1513
        %v1515 = vsel %vm823, %v1507, 0.0
        %1516 = vadd.xlane.f32.xlu0 %v1515
        %v1517 = vpop.xlane.xlu0 %1516
        %v1518 = vsel %vm823, %v1509, 0.0
        %1519 = vadd.xlane.f32.xlu0 %v1518
        %v1520 = vpop.xlane.xlu0 %1519
        %v1521 = vsel %vm823, %v1511, 0.0
        %1522 = vadd.xlane.f32.xlu0 %v1521
        %v1523 = vpop.xlane.xlu0 %1522
        %v1524 = vrcp.pop %v1514
        %v1525 = vrcp.pop %v1517
        %v1526 = vrcp.pop %v1520
        %v1527 = vrcp.pop %v1523
        %v1528 = vmul.f32 %v1505, %v1524
        %v1529 = vmul.f32 %v1507, %v1525
        %v1530 = vmul.f32 %v1509, %v1526
        %v1531 = vmul.f32 %v1511, %v1527
        %1532 = vrot.lane.b32.xlu0 %v492, 48
        %v1533 = vpop.permute.xlu0 %1532
        %v1536 = vsel %vm823, %v1528, 0
        %1538 = vmatprep.subr.mxu0 0.0
        %1539 = vmatpush1.msra.mxu0 0.0
        %1540 = vmatprep.subr.mxu0 0.0
        %1541 = vmatpush1.msra.mxu0 0.0
        %1542 = vmatprep.subr.mxu0 0.0
        %1543 = vmatpush1.msra.mxu0 0.0
        %1544 = vmatprep.subr.mxu0 0.0
        %1545 = vmatpush1.msra.mxu0 0.0
        %1546 = vmatprep.subr.mxu0 0.0
        %1547 = vmatpush1.msra.mxu0 0.0
        %1548 = vmatprep.subr.mxu0 0.0
        %1549 = vmatpush1.msra.mxu0 0.0
        %1550 = vmatprep.subr.mxu0 0.0
        %1551 = vmatpush1.msra.mxu0 0.0
        %1552 = vmatprep.subr.mxu0 0.0
        %1553 = vmatpush1.msra.mxu0 0.0
        %1554 = vmatprep.subr.mxu0 0.0
        %1555 = vmatpush1.msra.mxu0 0.0
        %1556 = vmatprep.subr.mxu0 0.0
        %1557 = vmatpush1.msra.mxu0 0.0
        %1558 = vmatprep.subr.mxu0 0.0
        %1559 = vmatpush1.msra.mxu0 0.0
        %1560 = vmatprep.subr.mxu0 0.0
        %1561 = vmatpush1.msra.mxu0 0.0
        %1562 = vmatprep.subr.mxu0 0.0
        %1563 = vmatpush1.msra.mxu0 0.0
        %1564 = vmatprep.subr.mxu0 0.0
        %1565 = vmatpush1.msra.mxu0 0.0
        %1566 = vmatprep.subr.mxu0 0.0
        %1567 = vmatpush1.msra.mxu0 0.0
        %1568 = vmatprep.subr.mxu0 0.0
        %1569 = vmatpush1.msra.mxu0 %v1533
        %1570 = vmatprep.subr.mxu0 0.0
        %1571 = vmatpush2.msra.mxu0 0.0
        %1572 = vmatprep.subr.mxu0 0.0
        %1573 = vmatpush2.msra.mxu0 0.0
        %1574 = vmatprep.subr.mxu0 0.0
        %1575 = vmatpush2.msra.mxu0 0.0
        %1576 = vmatprep.subr.mxu0 0.0
        %1577 = vmatpush2.msra.mxu0 0.0
        %1578 = vmatprep.subr.mxu0 0.0
        %1579 = vmatpush2.msra.mxu0 0.0
        %1580 = vmatprep.subr.mxu0 0.0
        %1581 = vmatpush2.msra.mxu0 0.0
        %1582 = vmatprep.subr.mxu0 0.0
        %1583 = vmatpush2.msra.mxu0 0.0
        %1584 = vmatprep.subr.mxu0 0.0
        %1585 = vmatpush2.msra.mxu0 0.0
        %1586 = vmatprep.subr.mxu0 0.0
        %1587 = vmatpush2.msra.mxu0 0.0
        %1588 = vmatprep.subr.mxu0 0.0
        %1589 = vmatpush2.msra.mxu0 0.0
        %1590 = vmatprep.subr.mxu0 0.0
        %1591 = vmatpush2.msra.mxu0 0.0
        %1592 = vmatprep.subr.mxu0 0.0
        %1593 = vmatpush2.msra.mxu0 0.0
        %1594 = vmatprep.subr.mxu0 0.0
        %1595 = vmatpush2.msra.mxu0 0.0
        %1596 = vmatprep.subr.mxu0 0.0
        %1597 = vmatpush2.msra.mxu0 0.0
        %1598 = vmatprep.subr.mxu0 0.0
        %1599 = vmatpush2.msra.mxu0 0.0
        %1600 = vmatprep.subr.mxu0 0.0
        %1601 = vmatpush2.msra.mxu0 0.0
        %1602 = vmatprep.mubr.f32.mxu0 0.0
        %1603 = vmatmul.mubr.f32.gmra.mxu0 %v1536
        %v1604 = vpop.f32.mrf.mxu0
        %v1605 = vadd.f32 0.0, %v1604
        %v1606 = vpop.f32.mrf.mxu0
        %1607 = vdwg.mxu0
        %1608 = vrot.lane.b32.xlu0 %v497, 48
        %v1609 = vpop.permute.xlu0 %1608
        %v1612 = vsel %vm823, %v1529, 0
        %1614 = vmatprep.subr.mxu0 0.0
        %1615 = vmatpush1.msra.mxu0 0.0
        %1616 = vmatprep.subr.mxu0 0.0
        %1617 = vmatpush1.msra.mxu0 0.0
        %1618 = vmatprep.subr.mxu0 0.0
        %1619 = vmatpush1.msra.mxu0 0.0
        %1620 = vmatprep.subr.mxu0 0.0
        %1621 = vmatpush1.msra.mxu0 0.0
        %1622 = vmatprep.subr.mxu0 0.0
        %1623 = vmatpush1.msra.mxu0 0.0
        %1624 = vmatprep.subr.mxu0 0.0
        %1625 = vmatpush1.msra.mxu0 0.0
        %1626 = vmatprep.subr.mxu0 0.0
        %1627 = vmatpush1.msra.mxu0 0.0
        %1628 = vmatprep.subr.mxu0 0.0
        %1629 = vmatpush1.msra.mxu0 0.0
        %1630 = vmatprep.subr.mxu0 0.0
        %1631 = vmatpush1.msra.mxu0 0.0
        %1632 = vmatprep.subr.mxu0 0.0
        %1633 = vmatpush1.msra.mxu0 0.0
        %1634 = vmatprep.subr.mxu0 0.0
        %1635 = vmatpush1.msra.mxu0 0.0
        %1636 = vmatprep.subr.mxu0 0.0
        %1637 = vmatpush1.msra.mxu0 0.0
        %1638 = vmatprep.subr.mxu0 0.0
        %1639 = vmatpush1.msra.mxu0 0.0
        %1640 = vmatprep.subr.mxu0 0.0
        %1641 = vmatpush1.msra.mxu0 0.0
        %1642 = vmatprep.subr.mxu0 0.0
        %1643 = vmatpush1.msra.mxu0 0.0
        %1644 = vmatprep.subr.mxu0 0.0
        %1645 = vmatpush1.msra.mxu0 %v1609
        %1646 = vmatprep.subr.mxu0 0.0
        %1647 = vmatpush2.msra.mxu0 0.0
        %1648 = vmatprep.subr.mxu0 0.0
        %1649 = vmatpush2.msra.mxu0 0.0
        %1650 = vmatprep.subr.mxu0 0.0
        %1651 = vmatpush2.msra.mxu0 0.0
        %1652 = vmatprep.subr.mxu0 0.0
        %1653 = vmatpush2.msra.mxu0 0.0
        %1654 = vmatprep.subr.mxu0 0.0
        %1655 = vmatpush2.msra.mxu0 0.0
        %1656 = vmatprep.subr.mxu0 0.0
        %1657 = vmatpush2.msra.mxu0 0.0
        %1658 = vmatprep.subr.mxu0 0.0
        %1659 = vmatpush2.msra.mxu0 0.0
        %1660 = vmatprep.subr.mxu0 0.0
        %1661 = vmatpush2.msra.mxu0 0.0
        %1662 = vmatprep.subr.mxu0 0.0
        %1663 = vmatpush2.msra.mxu0 0.0
        %1664 = vmatprep.subr.mxu0 0.0
        %1665 = vmatpush2.msra.mxu0 0.0
        %1666 = vmatprep.subr.mxu0 0.0
        %1667 = vmatpush2.msra.mxu0 0.0
        %1668 = vmatprep.subr.mxu0 0.0
        %1669 = vmatpush2.msra.mxu0 0.0
        %1670 = vmatprep.subr.mxu0 0.0
        %1671 = vmatpush2.msra.mxu0 0.0
        %1672 = vmatprep.subr.mxu0 0.0
        %1673 = vmatpush2.msra.mxu0 0.0
        %1674 = vmatprep.subr.mxu0 0.0
        %1675 = vmatpush2.msra.mxu0 0.0
        %1676 = vmatprep.subr.mxu0 0.0
        %1677 = vmatpush2.msra.mxu0 0.0
        %1678 = vmatprep.mubr.f32.mxu0 0.0
        %1679 = vmatmul.mubr.f32.gmra.mxu0 %v1612
        %v1680 = vpop.f32.mrf.mxu0
        %v1681 = vadd.f32 0.0, %v1680
        %v1682 = vpop.f32.mrf.mxu0
        %1683 = vdwg.mxu0
        %1684 = vrot.lane.b32.xlu0 %v502, 48
        %v1685 = vpop.permute.xlu0 %1684
        %v1688 = vsel %vm823, %v1530, 0
        %1690 = vmatprep.subr.mxu0 0.0
        %1691 = vmatpush1.msra.mxu0 0.0
        %1692 = vmatprep.subr.mxu0 0.0
        %1693 = vmatpush1.msra.mxu0 0.0
        %1694 = vmatprep.subr.mxu0 0.0
        %1695 = vmatpush1.msra.mxu0 0.0
        %1696 = vmatprep.subr.mxu0 0.0
        %1697 = vmatpush1.msra.mxu0 0.0
        %1698 = vmatprep.subr.mxu0 0.0
        %1699 = vmatpush1.msra.mxu0 0.0
        %1700 = vmatprep.subr.mxu0 0.0
        %1701 = vmatpush1.msra.mxu0 0.0
        %1702 = vmatprep.subr.mxu0 0.0
        %1703 = vmatpush1.msra.mxu0 0.0
        %1704 = vmatprep.subr.mxu0 0.0
        %1705 = vmatpush1.msra.mxu0 0.0
        %1706 = vmatprep.subr.mxu0 0.0
        %1707 = vmatpush1.msra.mxu0 0.0
        %1708 = vmatprep.subr.mxu0 0.0
        %1709 = vmatpush1.msra.mxu0 0.0
        %1710 = vmatprep.subr.mxu0 0.0
        %1711 = vmatpush1.msra.mxu0 0.0
        %1712 = vmatprep.subr.mxu0 0.0
        %1713 = vmatpush1.msra.mxu0 0.0
        %1714 = vmatprep.subr.mxu0 0.0
        %1715 = vmatpush1.msra.mxu0 0.0
        %1716 = vmatprep.subr.mxu0 0.0
        %1717 = vmatpush1.msra.mxu0 0.0
        %1718 = vmatprep.subr.mxu0 0.0
        %1719 = vmatpush1.msra.mxu0 0.0
        %1720 = vmatprep.subr.mxu0 0.0
        %1721 = vmatpush1.msra.mxu0 %v1685
        %1722 = vmatprep.subr.mxu0 0.0
        %1723 = vmatpush2.msra.mxu0 0.0
        %1724 = vmatprep.subr.mxu0 0.0
        %1725 = vmatpush2.msra.mxu0 0.0
        %1726 = vmatprep.subr.mxu0 0.0
        %1727 = vmatpush2.msra.mxu0 0.0
        %1728 = vmatprep.subr.mxu0 0.0
        %1729 = vmatpush2.msra.mxu0 0.0
        %1730 = vmatprep.subr.mxu0 0.0
        %1731 = vmatpush2.msra.mxu0 0.0
        %1732 = vmatprep.subr.mxu0 0.0
        %1733 = vmatpush2.msra.mxu0 0.0
        %1734 = vmatprep.subr.mxu0 0.0
        %1735 = vmatpush2.msra.mxu0 0.0
        %1736 = vmatprep.subr.mxu0 0.0
        %1737 = vmatpush2.msra.mxu0 0.0
        %1738 = vmatprep.subr.mxu0 0.0
        %1739 = vmatpush2.msra.mxu0 0.0
        %1740 = vmatprep.subr.mxu0 0.0
        %1741 = vmatpush2.msra.mxu0 0.0
        %1742 = vmatprep.subr.mxu0 0.0
        %1743 = vmatpush2.msra.mxu0 0.0
        %1744 = vmatprep.subr.mxu0 0.0
        %1745 = vmatpush2.msra.mxu0 0.0
        %1746 = vmatprep.subr.mxu0 0.0
        %1747 = vmatpush2.msra.mxu0 0.0
        %1748 = vmatprep.subr.mxu0 0.0
        %1749 = vmatpush2.msra.mxu0 0.0
        %1750 = vmatprep.subr.mxu0 0.0
        %1751 = vmatpush2.msra.mxu0 0.0
        %1752 = vmatprep.subr.mxu0 0.0
        %1753 = vmatpush2.msra.mxu0 0.0
        %1754 = vmatprep.mubr.f32.mxu0 0.0
        %1755 = vmatmul.mubr.f32.gmra.mxu0 %v1688
        %v1756 = vpop.f32.mrf.mxu0
        %v1757 = vadd.f32 0.0, %v1756
        %v1758 = vpop.f32.mrf.mxu0
        %1759 = vdwg.mxu0
        %1760 = vrot.lane.b32.xlu0 %v507, 48
        %v1761 = vpop.permute.xlu0 %1760
        %v1764 = vsel %vm823, %v1531, 0
        %1766 = vmatprep.subr.mxu0 0.0
        %1767 = vmatpush1.msra.mxu0 0.0
        %1768 = vmatprep.subr.mxu0 0.0
        %1769 = vmatpush1.msra.mxu0 0.0
        %1770 = vmatprep.subr.mxu0 0.0
        %1771 = vmatpush1.msra.mxu0 0.0
        %1772 = vmatprep.subr.mxu0 0.0
        %1773 = vmatpush1.msra.mxu0 0.0
        %1774 = vmatprep.subr.mxu0 0.0
        %1775 = vmatpush1.msra.mxu0 0.0
        %1776 = vmatprep.subr.mxu0 0.0
        %1777 = vmatpush1.msra.mxu0 0.0
        %1778 = vmatprep.subr.mxu0 0.0
        %1779 = vmatpush1.msra.mxu0 0.0
        %1780 = vmatprep.subr.mxu0 0.0
        %1781 = vmatpush1.msra.mxu0 0.0
        %1782 = vmatprep.subr.mxu0 0.0
        %1783 = vmatpush1.msra.mxu0 0.0
        %1784 = vmatprep.subr.mxu0 0.0
        %1785 = vmatpush1.msra.mxu0 0.0
        %1786 = vmatprep.subr.mxu0 0.0
        %1787 = vmatpush1.msra.mxu0 0.0
        %1788 = vmatprep.subr.mxu0 0.0
        %1789 = vmatpush1.msra.mxu0 0.0
        %1790 = vmatprep.subr.mxu0 0.0
        %1791 = vmatpush1.msra.mxu0 0.0
        %1792 = vmatprep.subr.mxu0 0.0
        %1793 = vmatpush1.msra.mxu0 0.0
        %1794 = vmatprep.subr.mxu0 0.0
        %1795 = vmatpush1.msra.mxu0 0.0
        %1796 = vmatprep.subr.mxu0 0.0
        %1797 = vmatpush1.msra.mxu0 %v1761
        %1798 = vmatprep.subr.mxu0 0.0
        %1799 = vmatpush2.msra.mxu0 0.0
        %1800 = vmatprep.subr.mxu0 0.0
        %1801 = vmatpush2.msra.mxu0 0.0
        %1802 = vmatprep.subr.mxu0 0.0
        %1803 = vmatpush2.msra.mxu0 0.0
        %1804 = vmatprep.subr.mxu0 0.0
        %1805 = vmatpush2.msra.mxu0 0.0
        %1806 = vmatprep.subr.mxu0 0.0
        %1807 = vmatpush2.msra.mxu0 0.0
        %1808 = vmatprep.subr.mxu0 0.0
        %1809 = vmatpush2.msra.mxu0 0.0
        %1810 = vmatprep.subr.mxu0 0.0
        %1811 = vmatpush2.msra.mxu0 0.0
        %1812 = vmatprep.subr.mxu0 0.0
        %1813 = vmatpush2.msra.mxu0 0.0
        %1814 = vmatprep.subr.mxu0 0.0
        %1815 = vmatpush2.msra.mxu0 0.0
        %1816 = vmatprep.subr.mxu0 0.0
        %1817 = vmatpush2.msra.mxu0 0.0
        %1818 = vmatprep.subr.mxu0 0.0
        %1819 = vmatpush2.msra.mxu0 0.0
        %1820 = vmatprep.subr.mxu0 0.0
        %1821 = vmatpush2.msra.mxu0 0.0
        %1822 = vmatprep.subr.mxu0 0.0
        %1823 = vmatpush2.msra.mxu0 0.0
        %1824 = vmatprep.subr.mxu0 0.0
        %1825 = vmatpush2.msra.mxu0 0.0
        %1826 = vmatprep.subr.mxu0 0.0
        %1827 = vmatpush2.msra.mxu0 0.0
        %1828 = vmatprep.subr.mxu0 0.0
        %1829 = vmatpush2.msra.mxu0 0.0
        %1830 = vmatprep.mubr.f32.mxu0 0.0
        %1831 = vmatmul.mubr.f32.gmra.mxu0 %v1764
        %v1832 = vpop.f32.mrf.mxu0
        %v1833 = vadd.f32 0.0, %v1832
        %v1834 = vpop.f32.mrf.mxu0
        %1835 = vdwg.mxu0
        %1840 = vrot.lane.b32.xlu0 %v1605, 16
        %v1841 = vpop.permute.xlu0 %1840
        %1842 = vrot.lane.b32.xlu0 %v1681, 16
        %v1843 = vpop.permute.xlu0 %1842
        %1844 = vrot.lane.b32.xlu0 %v1757, 16
        %v1845 = vpop.permute.xlu0 %1844
        %1846 = vrot.lane.b32.xlu0 %v1833, 16
        %v1847 = vpop.permute.xlu0 %1846
        %v1852 = vsel %vm513, %v941, %v1841
        %v1853 = vsel %vm513, %v1017, %v1843
        %v1854 = vsel %vm513, %v1093, %v1845
        %v1855 = vsel %vm513, %v1169, %v1847
        %v1856 = vld [vmem:[#allocation7] sm:$0xff]
        %v1857 = vld [vmem:[#allocation7 + $0x8] sm:$0xff]
        %v1858 = vld [vmem:[#allocation7 + $0x10] sm:$0xff]
        %v1859 = vld [vmem:[#allocation7 + $0x18] sm:$0xff]
        %v1860 = vld [vmem:[%s4] sm:$0x1]
        %v1862 = vlaneseq
        %v1863 = vshrl.u32 %v1862, 7
        %v1864 = vsub.s32 0, %v1863
        %v1865 = vrot.slane %v1860, %v1864
        %v1868 = vsel %vm412, %v1852, 0
        %v1871 = vsel %vm412, %v1853, 0
        %v1874 = vsel %vm412, %v1854, 0
        %v1877 = vsel %vm412, %v1855, 0
        %1879 = vmatprep.subr.mxu0 0.0
        %1880 = vmatpush1.msra.mxu0 0.0
        %1881 = vmatprep.subr.mxu0 0.0
        %1882 = vmatpush1.msra.mxu0 0.0
        %1883 = vmatprep.subr.mxu0 0.0
        %1884 = vmatpush1.msra.mxu0 0.0
        %1885 = vmatprep.subr.mxu0 0.0
        %1886 = vmatpush1.msra.mxu0 0.0
        %1887 = vmatprep.subr.mxu0 0.0
        %1888 = vmatpush1.msra.mxu0 0.0
        %1889 = vmatprep.subr.mxu0 0.0
        %1890 = vmatpush1.msra.mxu0 0.0
        %1891 = vmatprep.subr.mxu0 0.0
        %1892 = vmatpush1.msra.mxu0 0.0
        %1893 = vmatprep.subr.mxu0 0.0
        %1894 = vmatpush1.msra.mxu0 0.0
        %1895 = vmatprep.subr.mxu0 0.0
        %1896 = vmatpush1.msra.mxu0 0.0
        %1897 = vmatprep.subr.mxu0 0.0
        %1898 = vmatpush1.msra.mxu0 0.0
        %1899 = vmatprep.subr.mxu0 0.0
        %1900 = vmatpush1.msra.mxu0 0.0
        %1901 = vmatprep.subr.mxu0 0.0
        %1902 = vmatpush1.msra.mxu0 0.0
        %1903 = vmatprep.subr.mxu0 0.0
        %1904 = vmatpush1.msra.mxu0 %v1859
        %1905 = vmatprep.subr.mxu0 0.0
        %1906 = vmatpush1.msra.mxu0 %v1858
        %1907 = vmatprep.subr.mxu0 0.0
        %1908 = vmatpush1.msra.mxu0 %v1857
        %1909 = vmatprep.subr.mxu0 0.0
        %1910 = vmatpush1.msra.mxu0 %v1856
        %1911 = vmatprep.subr.mxu0 0.0
        %1912 = vmatpush2.msra.mxu0 0.0
        %1913 = vmatprep.subr.mxu0 0.0
        %1914 = vmatpush2.msra.mxu0 0.0
        %1915 = vmatprep.subr.mxu0 0.0
        %1916 = vmatpush2.msra.mxu0 0.0
        %1917 = vmatprep.subr.mxu0 0.0
        %1918 = vmatpush2.msra.mxu0 0.0
        %1919 = vmatprep.subr.mxu0 0.0
        %1920 = vmatpush2.msra.mxu0 0.0
        %1921 = vmatprep.subr.mxu0 0.0
        %1922 = vmatpush2.msra.mxu0 0.0
        %1923 = vmatprep.subr.mxu0 0.0
        %1924 = vmatpush2.msra.mxu0 0.0
        %1925 = vmatprep.subr.mxu0 0.0
        %1926 = vmatpush2.msra.mxu0 0.0
        %1927 = vmatprep.subr.mxu0 0.0
        %1928 = vmatpush2.msra.mxu0 0.0
        %1929 = vmatprep.subr.mxu0 0.0
        %1930 = vmatpush2.msra.mxu0 0.0
        %1931 = vmatprep.subr.mxu0 0.0
        %1932 = vmatpush2.msra.mxu0 0.0
        %1933 = vmatprep.subr.mxu0 0.0
        %1934 = vmatpush2.msra.mxu0 0.0
        %1935 = vmatprep.subr.mxu0 0.0
        %1936 = vmatpush2.msra.mxu0 0.0
        %1937 = vmatprep.subr.mxu0 0.0
        %1938 = vmatpush2.msra.mxu0 0.0
        %1939 = vmatprep.subr.mxu0 0.0
        %1940 = vmatpush2.msra.mxu0 0.0
        %1941 = vmatprep.subr.mxu0 0.0
        %1942 = vmatpush2.msra.mxu0 0.0
        %1943 = vmatprep.mubr.f32.mxu0 0.0
        %1944 = vmatmul.mubr.f32.gmra.mxu0 %v1868
        %v1945 = vpop.f32.mrf.mxu0
        %v1946 = vadd.f32 %v1865, %v1945
        %v1947 = vpop.f32.mrf.mxu0
        %1948 = vmatprep.mubr.f32.mxu0 0.0
        %1949 = vmatmul.mubr.f32.gmra.mxu0 %v1871
        %v1950 = vpop.f32.mrf.mxu0
        %v1951 = vadd.f32 %v1865, %v1950
        %v1952 = vpop.f32.mrf.mxu0
        %1953 = vmatprep.mubr.f32.mxu0 0.0
        %1954 = vmatmul.mubr.f32.gmra.mxu0 %v1874
        %v1955 = vpop.f32.mrf.mxu0
        %v1956 = vadd.f32 %v1865, %v1955
        %v1957 = vpop.f32.mrf.mxu0
        %1958 = vmatprep.mubr.f32.mxu0 0.0
        %1959 = vmatmul.mubr.f32.gmra.mxu0 %v1877
        %v1960 = vpop.f32.mrf.mxu0
        %v1961 = vadd.f32 %v1865, %v1960
        %v1962 = vpop.f32.mrf.mxu0
        %1963 = vdwg.mxu0
        %v1964 = vadd.f32 %v397, %v1946
        %v1965 = vadd.f32 %v398, %v1951
        %v1966 = vadd.f32 %v399, %v1956
        %v1967 = vadd.f32 %v400, %v1961
        %v1968 = vsel %vm412, %v1964, 0.0
        %1969 = vadd.xlane.f32.xlu0 %v1968
        %v1970 = vpop.xlane.xlu0 %1969
        %v1971 = vsel %vm412, %v1965, 0.0
        %1972 = vadd.xlane.f32.xlu0 %v1971
        %v1973 = vpop.xlane.xlu0 %1972
        %v1974 = vsel %vm412, %v1966, 0.0
        %1975 = vadd.xlane.f32.xlu0 %v1974
        %v1976 = vpop.xlane.xlu0 %1975
        %v1977 = vsel %vm412, %v1967, 0.0
        %1978 = vadd.xlane.f32.xlu0 %v1977
        %v1979 = vpop.xlane.xlu0 %1978
        %v1980 = vrcp.pop 32.0
        %v1981 = vmul.f32 %v1970, %v1980
        %v1982 = vmul.f32 %v1973, %v1980
        %v1983 = vmul.f32 %v1976, %v1980
        %v1984 = vmul.f32 %v1979, %v1980
        %v1985 = vsub.f32 %v1964, %v1981
        %v1986 = vsub.f32 %v1965, %v1982
        %v1987 = vsub.f32 %v1966, %v1983
        %v1988 = vsub.f32 %v1967, %v1984
        %v1989 = vmul.f32 %v1985, %v1985
        %v1990 = vmul.f32 %v1986, %v1986
        %v1991 = vmul.f32 %v1987, %v1987
        %v1992 = vmul.f32 %v1988, %v1988
        %v1993 = vsel %vm412, %v1989, 0.0
        %1994 = vadd.xlane.f32.xlu0 %v1993
        %v1995 = vpop.xlane.xlu0 %1994
        %v1996 = vsel %vm412, %v1990, 0.0
        %1997 = vadd.xlane.f32.xlu0 %v1996
        %v1998 = vpop.xlane.xlu0 %1997
        %v1999 = vsel %vm412, %v1991, 0.0
        %2000 = vadd.xlane.f32.xlu0 %v1999
        %v2001 = vpop.xlane.xlu0 %2000
        %v2002 = vsel %vm412, %v1992, 0.0
        %2003 = vadd.xlane.f32.xlu0 %v2002
        %v2004 = vpop.xlane.xlu0 %2003
        %v2005 = vmul.f32 %v1995, %v1980
        %v2006 = vmul.f32 %v1998, %v1980
        %v2007 = vmul.f32 %v2001, %v1980
        %v2008 = vmul.f32 %v2004, %v1980
        %v2009 = vadd.f32 %v2005, 1e-05
        %v2010 = vadd.f32 %v2006, 1e-05
        %v2011 = vadd.f32 %v2007, 1e-05
        %v2012 = vadd.f32 %v2008, 1e-05
        %v2013 = vrsqrt.pop %v2009
        %v2014 = vrsqrt.pop %v2010
        %v2015 = vrsqrt.pop %v2011
        %v2016 = vrsqrt.pop %v2012
        %v2017 = vmul.f32 %v1985, %v2013
        %v2018 = vmul.f32 %v1986, %v2014
        %v2019 = vmul.f32 %v1987, %v2015
        %v2020 = vmul.f32 %v1988, %v2016
        %v2021 = vld [vmem:[%s5] sm:$0x1]
        %v2023 = vlaneseq
        %v2024 = vshrl.u32 %v2023, 7
        %v2025 = vsub.s32 0, %v2024
        %v2026 = vrot.slane %v2021, %v2025
        %v2028 = vmul.f32 %v2017, %v2026
        %v2029 = vmul.f32 %v2018, %v2026
        %v2030 = vmul.f32 %v2019, %v2026
        %v2031 = vmul.f32 %v2020, %v2026
        %v2032 = vld [vmem:[%s6] sm:$0x1]
        %v2034 = vlaneseq
        %v2035 = vshrl.u32 %v2034, 7
        %v2036 = vsub.s32 0, %v2035
        %v2037 = vrot.slane %v2032, %v2036
        %v2039 = vadd.f32 %v2028, %v2037
        %v2040 = vadd.f32 %v2029, %v2037
        %v2041 = vadd.f32 %v2030, %v2037
        %v2042 = vadd.f32 %v2031, %v2037
        %v2043 = vld [vmem:[#allocation8] sm:$0xff]
        %v2044 = vld [vmem:[#allocation8 + $0x8] sm:$0xff]
        %v2045 = vld [vmem:[#allocation8 + $0x10] sm:$0xff]
        %v2046 = vld [vmem:[#allocation8 + $0x18] sm:$0xff]
        %v2047 = vld [vmem:[%s8] sm:$0x1]
        %v2049 = vlaneseq
        %v2050 = vshrl.u32 %v2049, 7
        %v2051 = vsub.s32 0, %v2050
        %v2052 = vrot.slane %v2047, %v2051
        %v2055 = vsel %vm412, %v2039, 0
        %v2058 = vsel %vm412, %v2040, 0
        %v2061 = vsel %vm412, %v2041, 0
        %v2064 = vsel %vm412, %v2042, 0
        %2066 = vmatprep.subr.mxu0 0.0
        %2067 = vmatpush1.msra.mxu0 0.0
        %2068 = vmatprep.subr.mxu0 0.0
        %2069 = vmatpush1.msra.mxu0 0.0
        %2070 = vmatprep.subr.mxu0 0.0
        %2071 = vmatpush1.msra.mxu0 0.0
        %2072 = vmatprep.subr.mxu0 0.0
        %2073 = vmatpush1.msra.mxu0 0.0
        %2074 = vmatprep.subr.mxu0 0.0
        %2075 = vmatpush1.msra.mxu0 0.0
        %2076 = vmatprep.subr.mxu0 0.0
        %2077 = vmatpush1.msra.mxu0 0.0
        %2078 = vmatprep.subr.mxu0 0.0
        %2079 = vmatpush1.msra.mxu0 0.0
        %2080 = vmatprep.subr.mxu0 0.0
        %2081 = vmatpush1.msra.mxu0 0.0
        %2082 = vmatprep.subr.mxu0 0.0
        %2083 = vmatpush1.msra.mxu0 0.0
        %2084 = vmatprep.subr.mxu0 0.0
        %2085 = vmatpush1.msra.mxu0 0.0
        %2086 = vmatprep.subr.mxu0 0.0
        %2087 = vmatpush1.msra.mxu0 0.0
        %2088 = vmatprep.subr.mxu0 0.0
        %2089 = vmatpush1.msra.mxu0 0.0
        %2090 = vmatprep.subr.mxu0 0.0
        %2091 = vmatpush1.msra.mxu0 %v2046
        %2092 = vmatprep.subr.mxu0 0.0
        %2093 = vmatpush1.msra.mxu0 %v2045
        %2094 = vmatprep.subr.mxu0 0.0
        %2095 = vmatpush1.msra.mxu0 %v2044
        %2096 = vmatprep.subr.mxu0 0.0
        %2097 = vmatpush1.msra.mxu0 %v2043
        %2098 = vmatprep.subr.mxu0 0.0
        %2099 = vmatpush2.msra.mxu0 0.0
        %2100 = vmatprep.subr.mxu0 0.0
        %2101 = vmatpush2.msra.mxu0 0.0
        %2102 = vmatprep.subr.mxu0 0.0
        %2103 = vmatpush2.msra.mxu0 0.0
        %2104 = vmatprep.subr.mxu0 0.0
        %2105 = vmatpush2.msra.mxu0 0.0
        %2106 = vmatprep.subr.mxu0 0.0
        %2107 = vmatpush2.msra.mxu0 0.0
        %2108 = vmatprep.subr.mxu0 0.0
        %2109 = vmatpush2.msra.mxu0 0.0
        %2110 = vmatprep.subr.mxu0 0.0
        %2111 = vmatpush2.msra.mxu0 0.0
        %2112 = vmatprep.subr.mxu0 0.0
        %2113 = vmatpush2.msra.mxu0 0.0
        %2114 = vmatprep.subr.mxu0 0.0
        %2115 = vmatpush2.msra.mxu0 0.0
        %2116 = vmatprep.subr.mxu0 0.0
        %2117 = vmatpush2.msra.mxu0 0.0
        %2118 = vmatprep.subr.mxu0 0.0
        %2119 = vmatpush2.msra.mxu0 0.0
        %2120 = vmatprep.subr.mxu0 0.0
        %2121 = vmatpush2.msra.mxu0 0.0
        %2122 = vmatprep.subr.mxu0 0.0
        %2123 = vmatpush2.msra.mxu0 0.0
        %2124 = vmatprep.subr.mxu0 0.0
        %2125 = vmatpush2.msra.mxu0 0.0
        %2126 = vmatprep.subr.mxu0 0.0
        %2127 = vmatpush2.msra.mxu0 0.0
        %2128 = vmatprep.subr.mxu0 0.0
        %2129 = vmatpush2.msra.mxu0 0.0
        %2130 = vmatprep.mubr.f32.mxu0 0.0
        %2131 = vmatmul.mubr.f32.gmra.mxu0 %v2055
        %v2132 = vpop.f32.mrf.mxu0
        %v2133 = vadd.f32 %v2052, %v2132
        %v2134 = vpop.f32.mrf.mxu0
        %2135 = vmatprep.mubr.f32.mxu0 0.0
        %2136 = vmatmul.mubr.f32.gmra.mxu0 %v2058
        %v2137 = vpop.f32.mrf.mxu0
        %v2138 = vadd.f32 %v2052, %v2137
        %v2139 = vpop.f32.mrf.mxu0
        %2140 = vmatprep.mubr.f32.mxu0 0.0
        %2141 = vmatmul.mubr.f32.gmra.mxu0 %v2061
        %v2142 = vpop.f32.mrf.mxu0
        %v2143 = vadd.f32 %v2052, %v2142
        %v2144 = vpop.f32.mrf.mxu0
        %2145 = vmatprep.mubr.f32.mxu0 0.0
        %2146 = vmatmul.mubr.f32.gmra.mxu0 %v2064
        %v2147 = vpop.f32.mrf.mxu0
        %v2148 = vadd.f32 %v2052, %v2147
        %v2149 = vpop.f32.mrf.mxu0
        %2150 = vdwg.mxu0
        %2151 = vst [vmem:[%s394] sm:$0xff] %v2133
        %2152 = vst [vmem:[%s394 + $0x8] sm:$0xff] %v2138
        %2153 = vst [vmem:[%s394 + $0x10] sm:$0xff] %v2143
        %2154 = vst [vmem:[%s394 + $0x18] sm:$0xff] %v2148
        %s2155 = sand.u32 %s230, 1
        %s2156 = scalar_lea.sflag [#allocation4], %s2155
        %s2157 = sand.u32 %s230, 1
        %s2158 = smul.addr %s2157, 32
        %s2159 = scalar_lea.vmem [#allocation10], %s2158
        // Predicated region
        $region73: #{tpu_custom_call.1} parent=55 // pred_check
          %p2160 = pneg %p240
        $region74: #{tpu_custom_call.1} parent=55 // pred_check_branch
          %2162 = sbr.rel (%p2160) target = $region76
        $region75: #{tpu_custom_call.1} parent=55 // pred_region
          %s2163 = smul.u32 4, %s28
          %s2165 = ssub.s32 512, 512
          %2166 = vsyncadd %s2156, %s2165
          %s2167 = smul.addr %s2163, 128
          %s2168 = scalar_lea.hbm %s9, %s2167
          %s2169 = sshll.u32 %s2159, 4
          %s2170 = int_to_ptr.vmem [resolvable:$true] %s2169
          %2175 = dma.vmem_to_hbm [thread:$0]  %s2170, 512, %s2168, %s2156, 128, 128, 8
        $region76: #{tpu_custom_call.1} parent=55 // pred_fallthru
          _
      $region56: #{tpu_custom_call.1} parent=5 // pred_fallthru
        _
      %p2176 = scmp.le.s32.totalorder 2, %s23
      // Predicated region
      $region77: #{tpu_custom_call.1} parent=5 // pred_check
        %p2177 = pneg %p2176
      $region78: #{tpu_custom_call.1} parent=5 // pred_check_branch
        %2179 = sbr.rel (%p2177) target = $region80
      $region79: #{tpu_custom_call.1} parent=5 // pred_region
        %s2180 = ssub.s32 %s23, 2
        // Predicated region
        $region81: #{tpu_custom_call.1} parent=79 // pred_check
          %p2181 = pneg %p246
        $region82: #{tpu_custom_call.1} parent=79 // pred_check_branch
          %2183 = sbr.rel (%p2181) target = $region84
        $region83: #{tpu_custom_call.1} parent=79 // pred_region
          %s2184 = sand.u32 %s231, 1
          %s2185 = scalar_lea.sflag [#allocation4], %s2184
          %s2186 = sand.u32 %s231, 1
          %s2187 = smul.addr %s2186, 32
          %s2188 = scalar_lea.vmem [#allocation10], %s2187
          %2189 = dma.done %s2185, 512
        $region84: #{tpu_custom_call.1} parent=79 // pred_fallthru
          _
      $region80: #{tpu_custom_call.1} parent=5 // pred_fallthru
        _
    $region6: #{tpu_custom_call.1} parent=1 // loop_footer
      %s27 = sadd.s32 1, %s23
    $region7: #{tpu_custom_call.1} parent=1 // loop_footer_branch
      %22 = sbr.rel target = $region3
    $region8: #{tpu_custom_call.1} parent=1 // loop_exit
      _
    %2190 = vsyncpa [#allocation3], 1
    %s2191 = scalar_lea.sflag [#allocation3], 1
    %2192 = vsyncpa %s2191, 1
    %2193 = vsyncpa [#allocation6], 1
    %2194 = vsyncpa [#allocation9], 1
    %2195 = vsyncpa [#allocation4], 1
    %s2196 = scalar_lea.sflag [#allocation4], 1
    %2197 = vsyncpa %s2196, 1

</llo_original>
